<compile_context>
chip_gen: v6e
topology: v6e:2x2x1
jax: 0.10.0
libtpu: 0.0.40
codegen_flags: <defaults>
</compile_context>

<pallas_src>
import functools
import math

import jax
import jax.numpy as jnp
from jax import lax
from jax.experimental import pallas as pl
from jax.experimental.pallas import tpu as pltpu

EPS = 1e-5
_SQRT_2_OVER_PI = 0.7978845608028654


# ----------------------------- in-kernel helpers -----------------------------

def _layernorm(t, gamma, beta):
    """Feature-dim LayerNorm, biased variance, f32 math."""
    mu = jnp.mean(t, axis=-1, keepdims=True)
    var = jnp.mean((t - mu) ** 2, axis=-1, keepdims=True)
    return (t - mu) * lax.rsqrt(var + EPS) * gamma + beta


def _gelu_tanh(x):
    # TODO(synk): nn.GELU() default is exact-erf GELU; Mosaic has no erf
    # lowering, so we use the tanh approximation (max |err| ~3e-4) on the EUP.
    return 0.5 * x * (1.0 + jnp.tanh(_SQRT_2_OVER_PI * (x + 0.044715 * x * x * x)))


# --------------------------------- fused kernel -------------------------------

def _resampler_kernel(lat0_ref, x_ref, pos_ref, wq_ref, wk_ref, wv_ref, wo_ref,
                      ln_ref, g1_ref, w1_ref, g2_ref, w2_ref,
                      out_ref, xhat_ref, lat_ref, *, heads, dim_head):
    f32, bf16 = jnp.float32, jnp.bfloat16
    bt, N, D = x_ref.shape
    Ltot = out_ref.shape[1]
    layer = pl.program_id(1)

    # ---- once per batch tile: x + pos_emb, its LN stats, initial latents ------
    @pl.when(layer == 0)
    def _init():
        xp = x_ref[...].astype(f32) + pos_ref[...][None]            # x_with_pos
        mu = jnp.mean(xp, axis=-1, keepdims=True)
        var = jnp.mean((xp - mu) ** 2, axis=-1, keepdims=True)
        # LN statistics of x+pos are layer-independent; only the per-layer
        # gamma/beta affine is redone each layer below.
        xhat_ref[...] = ((xp - mu) * lax.rsqrt(var + EPS)).reshape(bt * N, D)
        lat_ref[...] = lat0_ref[...].reshape(bt * Ltot, D)

    # ---- per-layer parameters (layer picked by the BlockSpec index_map) -------
    ln = ln_ref[...]                                   # (6, D) f32, loaded once
    gx, bx = ln[0:1], ln[1:2]                          # attn: norm(x)
    gl, bl = ln[2:3], ln[3:4]                          # attn: norm_latents
    go, bo = ln[4:5], ln[5:6]                          # attn: to_out LayerNorm

    lat = lat_ref[...]                                 # (bt*Ltot, D) f32 resident
    xn = xhat_ref[...] * gx + bx                       # (bt*N, D)
    latn = _layernorm(lat, gl, bl)                     # (bt*Ltot, D)

    scale = dim_head ** -0.5
    xn_bf = xn.astype(bf16)                            # cast once, reused per head
    latn_bf = latn.astype(bf16)
    latnq_bf = (latn * scale).astype(bf16)             # fold q*scale pre-matmul

    # ---- PerceiverAttention: per-head lane-dense slabs, accumulate into attn --
    # NOTE: pick dim_head as a multiple of 128 and Ltot / bt*Ltot as multiples
    # of 8 (256 on v6e/v7x) for full MXU fill at real configs.
    # TODO(synk): optional attention `mask` path not implemented (mask=None).
    # TODO(synk): for large N, add flash-style tiling over the key axis.
    def head_body(h, attn_acc):
        wq_h, wk_h, wv_h, wo_h = wq_ref[h], wk_ref[h], wv_ref[h], wo_ref[h]
        qh = jnp.dot(latnq_bf, wq_h, preferred_element_type=f32).reshape(bt, Ltot, dim_head)
        kx = jnp.dot(xn_bf, wk_h, preferred_element_type=f32).reshape(bt, N, dim_head)
        vx = jnp.dot(xn_bf, wv_h, preferred_element_type=f32).reshape(bt, N, dim_head)
        kl = jnp.dot(latn_bf, wk_h, preferred_element_type=f32).reshape(bt, Ltot, dim_head)
        vl = jnp.dot(latn_bf, wv_h, preferred_element_type=f32).reshape(bt, Ltot, dim_head)
        # softmax over the concatenated key set [x ; latents], computed blockwise
        s_x = jnp.einsum('bid,bjd->bij', qh, kx, preferred_element_type=f32)
        s_l = jnp.einsum('bid,bjd->bij', qh, kl, preferred_element_type=f32)
        m = jnp.maximum(jnp.max(s_x, axis=-1, keepdims=True),
                        jnp.max(s_l, axis=-1, keepdims=True))
        e_x, e_l = jnp.exp(s_x - m), jnp.exp(s_l - m)
        inv = pl.reciprocal(jnp.sum(e_x, axis=-1, keepdims=True)
                            + jnp.sum(e_l, axis=-1, keepdims=True), approx=True)
        oh = (jnp.einsum('bij,bjd->bid', e_x, vx, preferred_element_type=f32)
              + jnp.einsum('bij,bjd->bid', e_l, vl, preferred_element_type=f32)) * inv
        oh = oh.reshape(bt * Ltot, dim_head)
        # accumulate through to_out instead of a lane-axis concatenate
        return attn_acc + jnp.dot(oh.astype(bf16), wo_h, preferred_element_type=f32)

    attn = lax.fori_loop(0, heads, head_body, jnp.zeros((bt * Ltot, D), f32))
    lat = lat + _layernorm(attn, go, bo)               # residual 1

    # ---- feedforward: LN -> Linear -> GELU -> LN -> Linear ---------------------
    h1 = jnp.dot(_layernorm(lat, g1_ref[...], 0.0).astype(bf16), w1_ref[...],
                 preferred_element_type=f32)
    h1 = _gelu_tanh(h1)
    h2 = jnp.dot(_layernorm(h1, g2_ref[...], 0.0).astype(bf16), w2_ref[...],
                 preferred_element_type=f32)
    lat_ref[...] = lat + h2                            # residual 2

    @pl.when(layer == pl.num_programs(1) - 1)
    def _finalize():
        out_ref[...] = lat_ref[...].reshape(bt, Ltot, D).astype(out_ref.dtype)


# ----------------------------------- wrapper ----------------------------------

def _round_up(v, m):
    return -(-v // m) * m


def _vmem_block_bytes(shape, dtype):
    """Bytes for one VMEM buffer of `shape`, padded to the (sublane, 128) tile."""
    item = jnp.dtype(dtype).itemsize
    s = [1, 1] + [int(d) for d in shape]
    sub = 8 * max(4 // item, 1)            # 8 sublanes for f32, 16 for bf16
    s[-1] = _round_up(s[-1], 128)
    s[-2] = _round_up(s[-2], sub)
    return math.prod(s) * item


def _default_num_batch_tiles():
    kind = ""
    try:
        kind = jax.devices()[0].device_kind.lower()
    except Exception:
        pass
    # v7x has 2 TensorCores/chip -> shard the "parallel" batch axis over >= 2
    # tiles; single-TC chips (v5e/v6e) prefer 1 tile so the stacked per-layer
    # weights stream from HBM exactly once.
    return 2 if ("v7" in kind or "7x" in kind) else 1


@functools.partial(jax.jit, static_argnames=("heads", "dim_head", "batch_tile"))
def perceiver_resampler(x, params, *, heads, dim_head, batch_tile=None):
    f32, bf16 = jnp.float32, jnp.bfloat16
    B, N, D = x.shape
    depth = params["wq"].shape[0]
    hidden = params["w1"].shape[-1]
    n_learned = params["latents"].shape[0]
    nlmp = (params["mp_w"].shape[1] // D) if "mp_w" in params else 0
    Ltot = nlmp + n_learned
    dh = dim_head

    # ---- initial latents in plain XLA (layer-0-only operands stay out of the
    #      hot kernel's resident, double-buffered input set) ---------------------
    lat_learned = jnp.broadcast_to(params["latents"][None].astype(f32),
                                   (B, n_learned, D))
    if nlmp > 0:
        xm = jnp.mean(x.astype(f32), axis=1)          # masked_mean(all-True) == mean of RAW x
        mu = jnp.mean(xm, axis=-1, keepdims=True)
        var = jnp.mean((xm - mu) ** 2, axis=-1, keepdims=True)
        xm = (xm - mu) * lax.rsqrt(var + EPS) * params["mp_gamma"]
        mp = jnp.dot(xm.astype(bf16), params["mp_w"],
                     preferred_element_type=f32) + params["mp_b"]
        lat0 = jnp.concatenate([mp.reshape(B, nlmp, D), lat_learned], axis=1)
    else:
        lat0 = lat_learned
    lat0 = lat0.astype(f32)

    # ---- batch tiling ----------------------------------------------------------
    if batch_tile is None:
        nb = _default_num_batch_tiles()
        bt = B // nb if B % nb == 0 else B
    else:
        bt = batch_tile
    assert B % bt == 0, (B, bt)
    nb = B // bt

    pos = params["pos_emb"][:N]                        # (N, D) f32

    kernel = functools.partial(_resampler_kernel, heads=heads, dim_head=dh)

    def const_spec(a):
        n = a.ndim
        return pl.BlockSpec(a.shape, lambda b, l: (0,) * n)

    def per_layer(a):                                  # (depth, ...) stacked weights
        n = a.ndim
        return pl.BlockSpec((None,) + tuple(a.shape[1:]),
                            lambda b, l: (l,) + (0,) * (n - 1))

    def batch_spec(shp):
        return pl.BlockSpec(shp, lambda b, l: (b, 0, 0))

    # ---- VMEM budget (computed, not guessed) ------------------------------------
    pipelined = [                                       # (kernel block shape, dtype)
        ((bt, Ltot, D), f32), ((bt, N, D), bf16), ((N, D), f32),
        ((heads, D, dh), bf16), ((heads, D, dh), bf16), ((heads, D, dh), bf16),
        ((heads, dh, D), bf16), ((6, D), f32), ((1, D), f32),
        ((D, hidden), bf16), ((1, hidden), f32), ((hidden, D), bf16),
        ((bt, Ltot, D), f32),                           # output block
    ]
    scratch = [((bt * N, D), f32), ((bt * Ltot, D), f32)]
    vmem_needed = (2 * sum(_vmem_block_bytes(s, d) for s, d in pipelined)
                   + sum(_vmem_block_bytes(s, d) for s, d in scratch))
    # 25% + 4 MiB headroom for Mosaic internal scratch / spills.  If this nears
    # ~60 MiB on v7x (64 MiB physical VMEM), shrink batch_tile or K-tile the FF.
    vmem_limit = min(int(vmem_needed * 1.25) + (4 << 20), 100 << 20)

    return pl.pallas_call(
        kernel,
        out_shape=jax.ShapeDtypeStruct((B, Ltot, D), f32),
        grid_spec=pltpu.PrefetchScalarGridSpec(
            num_scalar_prefetch=0,
            grid=(nb, depth),                           # layer axis innermost
            in_specs=[
                batch_spec((bt, Ltot, D)),              # initial latents (layer 0)
                batch_spec((bt, N, D)),                 # x (bf16)
                const_spec(pos),                        # pos_emb (f32)
                per_layer(params["wq"]), per_layer(params["wk"]),
                per_layer(params["wv"]), per_layer(params["wo"]),
                per_layer(params["ln"]), per_layer(params["g1"]),
                per_layer(params["w1"]), per_layer(params["g2"]),
                per_layer(params["w2"]),
            ],
            out_specs=batch_spec((bt, Ltot, D)),
            scratch_shapes=[pltpu.VMEM((bt * N, D), f32),      # normalized x+pos
                            pltpu.VMEM((bt * Ltot, D), f32)],  # resident latents
        ),
        input_output_aliases={0: 0},                    # lat0 buffer reused as output
        compiler_params=pltpu.CompilerParams(
            dimension_semantics=("parallel", "arbitrary"),
            vmem_limit_bytes=vmem_limit),
    )(lat0, x.astype(bf16), pos, params["wq"], params["wk"], params["wv"],
      params["wo"], params["ln"], params["g1"], params["w1"], params["g2"],
      params["w2"])


# ------------------------------ parameter init --------------------------------

def init_params(key, *, dim, depth, dim_head, heads, num_latents, nlmp,
                max_seq_len, ff_mult):
    hidden = dim * ff_mult
    f32, bf16 = jnp.float32, jnp.bfloat16
    k = jax.random.split(key, 10)

    def w(kk, shape):                                   # math-style (y = x @ W), bf16
        return (0.02 * jax.random.normal(kk, shape, f32)).astype(bf16)

    p = {
        "pos_emb": jax.random.normal(k[0], (max_seq_len, dim), f32),
        "latents": jax.random.normal(k[1], (num_latents, dim), f32),
        # per-layer, head-major attention weights
        "wq": w(k[4], (depth, heads, dim, dim_head)),
        "wk": w(k[5], (depth, heads, dim, dim_head)),
        "wv": w(k[9], (depth, heads, dim, dim_head)),
        "wo": w(k[6], (depth, heads, dim_head, dim)),
        # rows: [norm.w, norm.b, norm_latents.w, norm_latents.b, out_ln.w, out_ln.b]
        "ln": jnp.tile(jnp.stack([jnp.ones(dim), jnp.zeros(dim)] * 3)[None],
                       (depth, 1, 1)).astype(f32),
        "g1": jnp.ones((depth, 1, dim), f32),
        "w1": w(k[7], (depth, dim, hidden)),
        "g2": jnp.ones((depth, 1, hidden), f32),
        "w2": w(k[8], (depth, hidden, dim)),
    }
    if nlmp > 0:
        p["mp_gamma"] = jnp.ones((1, dim), f32)
        # Linear(dim, dim*nlmp) stored as (dim, nlmp*dim): column block i is
        # mean-pooled latent i (matches Rearrange 'b (n d) -> b n d').
        p["mp_w"] = w(k[2], (dim, nlmp * dim))
        p["mp_b"] = 0.02 * jax.random.normal(k[3], (1, nlmp * dim), f32)
    return p


# ----------------------------------- main -------------------------------------

if __name__ == "__main__":
    DIM = 32
    DEPTH = 2
    DIM_HEAD = 16
    HEADS = 2
    NUM_LATENTS = 8
    NUM_LATENTS_MEAN_POOLED = 4
    MAX_SEQ_LEN = 16
    FF_MULT = 4
    B, N = 2, 8

    pkey, xkey = jax.random.split(jax.random.PRNGKey(0))
    params = init_params(pkey, dim=DIM, depth=DEPTH, dim_head=DIM_HEAD,
                         heads=HEADS, num_latents=NUM_LATENTS,
                         nlmp=NUM_LATENTS_MEAN_POOLED,
                         max_seq_len=MAX_SEQ_LEN, ff_mult=FF_MULT)
    x = jax.random.normal(xkey, (B, N, DIM), jnp.float32)

    out = perceiver_resampler(x, params, heads=HEADS, dim_head=DIM_HEAD)
    out = jax.block_until_ready(out)

    expected = (B, NUM_LATENTS_MEAN_POOLED + NUM_LATENTS, DIM)
    assert out.shape == expected, (out.shape, expected)
    assert bool(jnp.all(jnp.isfinite(out)))
    print("KERNEL_OK")
</pallas_src>

<mosaic_0001>
module attributes {stable_mosaic.version = 11 : i64} {
  func.func @_resampler_kernel(%arg0: i32, %arg1: i32, %arg2: memref<2x12x32xf32, #tpu.memory_space<vmem>>, %arg3: memref<2x8x32xbf16, #tpu.memory_space<vmem>>, %arg4: memref<8x32xf32, #tpu.memory_space<vmem>>, %arg5: memref<1x2x32x16xbf16, #tpu.memory_space<vmem>>, %arg6: memref<1x2x32x16xbf16, #tpu.memory_space<vmem>>, %arg7: memref<1x2x32x16xbf16, #tpu.memory_space<vmem>>, %arg8: memref<1x2x16x32xbf16, #tpu.memory_space<vmem>>, %arg9: memref<1x6x32xf32, #tpu.memory_space<vmem>>, %arg10: memref<1x1x32xf32, #tpu.memory_space<vmem>>, %arg11: memref<1x32x128xbf16, #tpu.memory_space<vmem>>, %arg12: memref<1x1x128xf32, #tpu.memory_space<vmem>>, %arg13: memref<1x128x32xbf16, #tpu.memory_space<vmem>>, %arg14: memref<2x12x32xf32, #tpu.memory_space<vmem>>, %arg15: memref<16x32xf32, #tpu.memory_space<vmem>>, %arg16: memref<24x32xf32, #tpu.memory_space<vmem>>) attributes {dimension_semantics = [#tpu.dimension_semantics<parallel>, #tpu.dimension_semantics<arbitrary>], iteration_bounds = array<i64: 1, 2>, scalar_prefetch = 0 : i64, scratch_operands = 2 : i64, tpu.core_type = #tpu.core_type<tc>, window_params = [{transform_indices = @transform_0, window_bounds = array<i64: 2, 12, 32>}, {transform_indices = @transform_1, window_bounds = array<i64: 2, 8, 32>}, {pipeline_mode = #tpu.pipeline_mode<synchronous>, transform_indices = @transform_2, window_bounds = array<i64: 8, 32>}, {transform_indices = @transform_3, window_bounds = array<i64: 1, 2, 32, 16>}, {transform_indices = @transform_4, window_bounds = array<i64: 1, 2, 32, 16>}, {transform_indices = @transform_5, window_bounds = array<i64: 1, 2, 32, 16>}, {transform_indices = @transform_6, window_bounds = array<i64: 1, 2, 16, 32>}, {transform_indices = @transform_7, window_bounds = array<i64: 1, 6, 32>}, {transform_indices = @transform_8, window_bounds = array<i64: 1, 1, 32>}, {transform_indices = @transform_9, window_bounds = array<i64: 1, 32, 128>}, {transform_indices = @transform_10, window_bounds = array<i64: 1, 1, 128>}, {transform_indices = @transform_11, window_bounds = array<i64: 1, 128, 32>}, {transform_indices = @transform_12, window_bounds = array<i64: 2, 12, 32>}]} {
    %c0_i32 = arith.constant 0 : i32
    %0 = arith.cmpi eq, %arg1, %c0_i32 : i32
    %1 = arith.extui %0 : i1 to i32
    %c0_i32_0 = arith.constant 0 : i32
    %2 = arith.cmpi ne, %1, %c0_i32_0 : i32
    scf.if %2 {
      %c0_54 = arith.constant 0 : index
      %c0_55 = arith.constant 0 : index
      %c0_56 = arith.constant 0 : index
      %144 = vector.load %arg3[%c0_54, %c0_55, %c0_56] : memref<2x8x32xbf16, #tpu.memory_space<vmem>>, vector<2x8x32xbf16>
      %145 = arith.extf %144 : vector<2x8x32xbf16> to vector<2x8x32xf32>
      %c0_57 = arith.constant 0 : index
      %c0_58 = arith.constant 0 : index
      %146 = vector.load %arg4[%c0_57, %c0_58] : memref<8x32xf32, #tpu.memory_space<vmem>>, vector<8x32xf32>
      %147 = vector.shape_cast %146 : vector<8x32xf32> to vector<1x8x32xf32>
      %148 = vector.broadcast %147 : vector<1x8x32xf32> to vector<2x8x32xf32>
      %149 = arith.addf %145, %148 : vector<2x8x32xf32>
      %cst_59 = arith.constant dense<0.000000e+00> : vector<2x8xf32>
      %150 = vector.multi_reduction <add>, %149, %cst_59 [2] : vector<2x8x32xf32> to vector<2x8xf32>
      %151 = vector.shape_cast %150 : vector<2x8xf32> to vector<2x8x1xf32>
      %cst_60 = arith.constant 3.200000e+01 : f32
      %152 = vector.broadcast %cst_60 : f32 to vector<2x8x1xf32>
      %153 = arith.divf %151, %152 : vector<2x8x1xf32>
      %154 = vector.broadcast %153 : vector<2x8x1xf32> to vector<2x8x32xf32>
      %155 = arith.subf %149, %154 : vector<2x8x32xf32>
      %156 = arith.mulf %155, %155 : vector<2x8x32xf32>
      %cst_61 = arith.constant dense<0.000000e+00> : vector<2x8xf32>
      %157 = vector.multi_reduction <add>, %156, %cst_61 [2] : vector<2x8x32xf32> to vector<2x8xf32>
      %158 = vector.shape_cast %157 : vector<2x8xf32> to vector<2x8x1xf32>
      %cst_62 = arith.constant 3.200000e+01 : f32
      %159 = vector.broadcast %cst_62 : f32 to vector<2x8x1xf32>
      %160 = arith.divf %158, %159 : vector<2x8x1xf32>
      %161 = vector.broadcast %153 : vector<2x8x1xf32> to vector<2x8x32xf32>
      %162 = arith.subf %149, %161 : vector<2x8x32xf32>
      %cst_63 = arith.constant 9.99999974E-6 : f32
      %163 = vector.broadcast %cst_63 : f32 to vector<2x8x1xf32>
      %164 = arith.addf %160, %163 : vector<2x8x1xf32>
      %165 = math.rsqrt %164 : vector<2x8x1xf32>
      %166 = vector.broadcast %165 : vector<2x8x1xf32> to vector<2x8x32xf32>
      %167 = arith.mulf %162, %166 : vector<2x8x32xf32>
      %168 = vector.shape_cast %167 : vector<2x8x32xf32> to vector<16x32xf32>
      %c0_64 = arith.constant 0 : index
      %c0_65 = arith.constant 0 : index
      %169 = vector.load %arg15[%c0_64, %c0_65] : memref<16x32xf32, #tpu.memory_space<vmem>>, vector<16x32xf32>
      tpu.vector_store %arg15[%c0_64, %c0_65], %168 {strides = array<i32>} : memref<16x32xf32, #tpu.memory_space<vmem>>, vector<16x32xf32>,
      %c0_66 = arith.constant 0 : index
      %c0_67 = arith.constant 0 : index
      %c0_68 = arith.constant 0 : index
      %170 = vector.load %arg2[%c0_66, %c0_67, %c0_68] : memref<2x12x32xf32, #tpu.memory_space<vmem>>, vector<2x12x32xf32>
      %171 = vector.shape_cast %170 : vector<2x12x32xf32> to vector<24x32xf32>
      %c0_69 = arith.constant 0 : index
      %c0_70 = arith.constant 0 : index
      %172 = vector.load %arg16[%c0_69, %c0_70] : memref<24x32xf32, #tpu.memory_space<vmem>>, vector<24x32xf32>
      tpu.vector_store %arg16[%c0_69, %c0_70], %171 {strides = array<i32>} : memref<24x32xf32, #tpu.memory_space<vmem>>, vector<24x32xf32>,
    } else {
    }
    %c0 = arith.constant 0 : index
    %c0_1 = arith.constant 0 : index
    %c0_2 = arith.constant 0 : index
    %3 = vector.load %arg9[%c0, %c0_1, %c0_2] : memref<1x6x32xf32, #tpu.memory_space<vmem>>, vector<1x6x32xf32>
    %4 = vector.shape_cast %3 : vector<1x6x32xf32> to vector<6x32xf32>
    %5 = vector.extract_strided_slice %4 {offsets = [0, 0], sizes = [1, 32], strides = [1, 1]} : vector<6x32xf32> to vector<1x32xf32>
    %6 = vector.extract_strided_slice %4 {offsets = [1, 0], sizes = [1, 32], strides = [1, 1]} : vector<6x32xf32> to vector<1x32xf32>
    %7 = vector.extract_strided_slice %4 {offsets = [2, 0], sizes = [1, 32], strides = [1, 1]} : vector<6x32xf32> to vector<1x32xf32>
    %8 = vector.extract_strided_slice %4 {offsets = [3, 0], sizes = [1, 32], strides = [1, 1]} : vector<6x32xf32> to vector<1x32xf32>
    %9 = vector.extract_strided_slice %4 {offsets = [4, 0], sizes = [1, 32], strides = [1, 1]} : vector<6x32xf32> to vector<1x32xf32>
    %10 = vector.extract_strided_slice %4 {offsets = [5, 0], sizes = [1, 32], strides = [1, 1]} : vector<6x32xf32> to vector<1x32xf32>
    %c0_3 = arith.constant 0 : index
    %c0_4 = arith.constant 0 : index
    %11 = vector.load %arg16[%c0_3, %c0_4] : memref<24x32xf32, #tpu.memory_space<vmem>>, vector<24x32xf32>
    %c0_5 = arith.constant 0 : index
    %c0_6 = arith.constant 0 : index
    %12 = vector.load %arg15[%c0_5, %c0_6] : memref<16x32xf32, #tpu.memory_space<vmem>>, vector<16x32xf32>
    %13 = vector.broadcast %5 : vector<1x32xf32> to vector<16x32xf32>
    %14 = arith.mulf %12, %13 : vector<16x32xf32>
    %15 = vector.broadcast %6 : vector<1x32xf32> to vector<16x32xf32>
    %16 = arith.addf %14, %15 : vector<16x32xf32>
    %cst = arith.constant dense<0.000000e+00> : vector<24xf32>
    %17 = vector.multi_reduction <add>, %11, %cst [1] : vector<24x32xf32> to vector<24xf32>
    %18 = vector.shape_cast %17 : vector<24xf32> to vector<24x1xf32>
    %cst_7 = arith.constant 3.200000e+01 : f32
    %19 = vector.broadcast %cst_7 : f32 to vector<24x1xf32>
    %20 = arith.divf %18, %19 : vector<24x1xf32>
    %21 = vector.broadcast %20 : vector<24x1xf32> to vector<24x32xf32>
    %22 = arith.subf %11, %21 : vector<24x32xf32>
    %23 = arith.mulf %22, %22 : vector<24x32xf32>
    %cst_8 = arith.constant dense<0.000000e+00> : vector<24xf32>
    %24 = vector.multi_reduction <add>, %23, %cst_8 [1] : vector<24x32xf32> to vector<24xf32>
    %25 = vector.shape_cast %24 : vector<24xf32> to vector<24x1xf32>
    %cst_9 = arith.constant 3.200000e+01 : f32
    %26 = vector.broadcast %cst_9 : f32 to vector<24x1xf32>
    %27 = arith.divf %25, %26 : vector<24x1xf32>
    %28 = vector.broadcast %20 : vector<24x1xf32> to vector<24x32xf32>
    %29 = arith.subf %11, %28 : vector<24x32xf32>
    %cst_10 = arith.constant 9.99999974E-6 : f32
    %30 = vector.broadcast %cst_10 : f32 to vector<24x1xf32>
    %31 = arith.addf %27, %30 : vector<24x1xf32>
    %32 = math.rsqrt %31 : vector<24x1xf32>
    %33 = vector.broadcast %32 : vector<24x1xf32> to vector<24x32xf32>
    %34 = arith.mulf %29, %33 : vector<24x32xf32>
    %35 = vector.broadcast %7 : vector<1x32xf32> to vector<24x32xf32>
    %36 = arith.mulf %34, %35 : vector<24x32xf32>
    %37 = vector.broadcast %8 : vector<1x32xf32> to vector<24x32xf32>
    %38 = arith.addf %36, %37 : vector<24x32xf32>
    %39 = arith.truncf %16 : vector<16x32xf32> to vector<16x32xbf16>
    %40 = arith.truncf %38 : vector<24x32xf32> to vector<24x32xbf16>
    %cst_11 = arith.constant 2.500000e-01 : f32
    %41 = vector.broadcast %cst_11 : f32 to vector<24x32xf32>
    %42 = arith.mulf %38, %41 : vector<24x32xf32>
    %43 = arith.truncf %42 : vector<24x32xf32> to vector<24x32xbf16>
    %cst_12 = arith.constant 0.000000e+00 : f32
    %44 = vector.broadcast %cst_12 : f32 to vector<24x32xf32>
    %c0_i32_13 = arith.constant 0 : i32
    %c2_i32 = arith.constant 2 : i32
    %45 = arith.addi %c0_i32_13, %c2_i32 : i32
    %c1_i32 = arith.constant 1 : i32
    %46 = scf.for %arg17 = %c0_i32_13 to %45 step %c1_i32 iter_args(%arg18 = %44) -> (vector<24x32xf32>)  : i32 {
      %c0_54 = arith.constant 0 : index
      %144 = arith.index_cast %arg17 : i32 to index
      %c0_55 = arith.constant 0 : index
      %c0_56 = arith.constant 0 : index
      %145 = vector.load %arg5[%c0_54, %144, %c0_55, %c0_56] : memref<1x2x32x16xbf16, #tpu.memory_space<vmem>>, vector<1x1x32x16xbf16>
      %146 = vector.shape_cast %145 : vector<1x1x32x16xbf16> to vector<32x16xbf16>
      %c0_57 = arith.constant 0 : index
      %147 = arith.index_cast %arg17 : i32 to index
      %c0_58 = arith.constant 0 : index
      %c0_59 = arith.constant 0 : index
      %148 = vector.load %arg6[%c0_57, %147, %c0_58, %c0_59] : memref<1x2x32x16xbf16, #tpu.memory_space<vmem>>, vector<1x1x32x16xbf16>
      %149 = vector.shape_cast %148 : vector<1x1x32x16xbf16> to vector<32x16xbf16>
      %c0_60 = arith.constant 0 : index
      %150 = arith.index_cast %arg17 : i32 to index
      %c0_61 = arith.constant 0 : index
      %c0_62 = arith.constant 0 : index
      %151 = vector.load %arg7[%c0_60, %150, %c0_61, %c0_62] : memref<1x2x32x16xbf16, #tpu.memory_space<vmem>>, vector<1x1x32x16xbf16>
      %152 = vector.shape_cast %151 : vector<1x1x32x16xbf16> to vector<32x16xbf16>
      %c0_63 = arith.constant 0 : index
      %153 = arith.index_cast %arg17 : i32 to index
      %c0_64 = arith.constant 0 : index
      %c0_65 = arith.constant 0 : index
      %154 = vector.load %arg8[%c0_63, %153, %c0_64, %c0_65] : memref<1x2x16x32xbf16, #tpu.memory_space<vmem>>, vector<1x1x16x32xbf16>
      %155 = vector.shape_cast %154 : vector<1x1x16x32xbf16> to vector<16x32xbf16>
      %cst_66 = arith.constant dense<0.000000e+00> : vector<24x16xf32>
      %156 = tpu.matmul %43, %146, %cst_66 {dimension_numbers = #tpu.dot_dimension_numbers<[1], [0], [0], [1], [0, 0, 1, 1], [], []>} : vector<24x32xbf16>, vector<32x16xbf16>, vector<24x16xf32> -> vector<24x16xf32>
      %157 = vector.shape_cast %156 : vector<24x16xf32> to vector<2x12x16xf32>
      %cst_67 = arith.constant dense<0.000000e+00> : vector<16x16xf32>
      %158 = tpu.matmul %39, %149, %cst_67 {dimension_numbers = #tpu.dot_dimension_numbers<[1], [0], [0], [1], [0, 0, 1, 1], [], []>} : vector<16x32xbf16>, vector<32x16xbf16>, vector<16x16xf32> -> vector<16x16xf32>
      %159 = vector.shape_cast %158 : vector<16x16xf32> to vector<2x8x16xf32>
      %cst_68 = arith.constant dense<0.000000e+00> : vector<16x16xf32>
      %160 = tpu.matmul %39, %152, %cst_68 {dimension_numbers = #tpu.dot_dimension_numbers<[1], [0], [0], [1], [0, 0, 1, 1], [], []>} : vector<16x32xbf16>, vector<32x16xbf16>, vector<16x16xf32> -> vector<16x16xf32>
      %161 = vector.shape_cast %160 : vector<16x16xf32> to vector<2x8x16xf32>
      %cst_69 = arith.constant dense<0.000000e+00> : vector<24x16xf32>
      %162 = tpu.matmul %40, %149, %cst_69 {dimension_numbers = #tpu.dot_dimension_numbers<[1], [0], [0], [1], [0, 0, 1, 1], [], []>} : vector<24x32xbf16>, vector<32x16xbf16>, vector<24x16xf32> -> vector<24x16xf32>
      %163 = vector.shape_cast %162 : vector<24x16xf32> to vector<2x12x16xf32>
      %cst_70 = arith.constant dense<0.000000e+00> : vector<24x16xf32>
      %164 = tpu.matmul %40, %152, %cst_70 {dimension_numbers = #tpu.dot_dimension_numbers<[1], [0], [0], [1], [0, 0, 1, 1], [], []>} : vector<24x32xbf16>, vector<32x16xbf16>, vector<24x16xf32> -> vector<24x16xf32>
      %165 = vector.shape_cast %164 : vector<24x16xf32> to vector<2x12x16xf32>
      "tpu.trace_start"() <{level = 10 : i32, message = "bid,bjd->bij"}> : () -> ()
      %cst_71 = arith.constant dense<0.000000e+00> : vector<2x12x8xf32>
      %166 = tpu.matmul %157, %159, %cst_71 {dimension_numbers = #tpu.dot_dimension_numbers<[2], [2], [1], [1], [0, 0, 0, 1, 1, 1], [0], [0]>} : vector<2x12x16xf32>, vector<2x8x16xf32>, vector<2x12x8xf32> -> vector<2x12x8xf32>
      %cst_72 = arith.constant dense<0.000000e+00> : vector<2x12x12xf32>
      %167 = tpu.matmul %157, %163, %cst_72 {dimension_numbers = #tpu.dot_dimension_numbers<[2], [2], [1], [1], [0, 0, 0, 1, 1, 1], [0], [0]>} : vector<2x12x16xf32>, vector<2x12x16xf32>, vector<2x12x12xf32> -> vector<2x12x12xf32>
      "tpu.trace_stop"() : () -> ()
      %cst_73 = arith.constant dense<0xFF800000> : vector<2x12xf32>
      %168 = vector.multi_reduction <maximumf>, %166, %cst_73 [2] : vector<2x12x8xf32> to vector<2x12xf32>
      %169 = vector.shape_cast %168 : vector<2x12xf32> to vector<2x12x1xf32>
      %cst_74 = arith.constant dense<0xFF800000> : vector<2x12xf32>
      %170 = vector.multi_reduction <maximumf>, %167, %cst_74 [2] : vector<2x12x12xf32> to vector<2x12xf32>
      %171 = vector.shape_cast %170 : vector<2x12xf32> to vector<2x12x1xf32>
      %172 = arith.maximumf %169, %171 : vector<2x12x1xf32>
      %173 = vector.broadcast %172 : vector<2x12x1xf32> to vector<2x12x8xf32>
      %174 = arith.subf %166, %173 : vector<2x12x8xf32>
      %175 = math.exp %174 : vector<2x12x8xf32>
      %176 = vector.broadcast %172 : vector<2x12x1xf32> to vector<2x12x12xf32>
      %177 = arith.subf %167, %176 : vector<2x12x12xf32>
      %178 = math.exp %177 : vector<2x12x12xf32>
      %cst_75 = arith.constant dense<0.000000e+00> : vector<2x12xf32>
      %179 = vector.multi_reduction <add>, %175, %cst_75 [2] : vector<2x12x8xf32> to vector<2x12xf32>
      %180 = vector.shape_cast %179 : vector<2x12xf32> to vector<2x12x1xf32>
      %cst_76 = arith.constant dense<0.000000e+00> : vector<2x12xf32>
      %181 = vector.multi_reduction <add>, %178, %cst_76 [2] : vector<2x12x12xf32> to vector<2x12xf32>
      %182 = vector.shape_cast %181 : vector<2x12xf32> to vector<2x12x1xf32>
      %183 = arith.addf %180, %182 : vector<2x12x1xf32>
      %184 = tpu.reciprocal %183 {approx = true} : vector<2x12x1xf32> -> vector<2x12x1xf32>
      "tpu.trace_start"() <{level = 10 : i32, message = "bij,bjd->bid"}> : () -> ()
      %cst_77 = arith.constant dense<0.000000e+00> : vector<2x12x16xf32>
      %185 = tpu.matmul %175, %161, %cst_77 {dimension_numbers = #tpu.dot_dimension_numbers<[2], [1], [1], [2], [0, 0, 0, 1, 1, 2], [0], [0]>} : vector<2x12x8xf32>, vector<2x8x16xf32>, vector<2x12x16xf32> -> vector<2x12x16xf32>
      %cst_78 = arith.constant dense<0.000000e+00> : vector<2x12x16xf32>
      %186 = tpu.matmul %178, %165, %cst_78 {dimension_numbers = #tpu.dot_dimension_numbers<[2], [1], [1], [2], [0, 0, 0, 1, 1, 2], [0], [0]>} : vector<2x12x12xf32>, vector<2x12x16xf32>, vector<2x12x16xf32> -> vector<2x12x16xf32>
      "tpu.trace_stop"() : () -> ()
      %187 = arith.addf %185, %186 : vector<2x12x16xf32>
      %188 = vector.broadcast %184 : vector<2x12x1xf32> to vector<2x12x16xf32>
      %189 = arith.mulf %187, %188 : vector<2x12x16xf32>
      %190 = vector.shape_cast %189 : vector<2x12x16xf32> to vector<24x16xf32>
      %191 = arith.truncf %190 : vector<24x16xf32> to vector<24x16xbf16>
      %cst_79 = arith.constant dense<0.000000e+00> : vector<24x32xf32>
      %192 = tpu.matmul %191, %155, %cst_79 {dimension_numbers = #tpu.dot_dimension_numbers<[1], [0], [0], [1], [0, 0, 1, 1], [], []>} : vector<24x16xbf16>, vector<16x32xbf16>, vector<24x32xf32> -> vector<24x32xf32>
      %193 = arith.addf %arg18, %192 : vector<24x32xf32>
      scf.yield %193 : vector<24x32xf32>
    }
    %c2_i32_14 = arith.constant 2 : i32
    %cst_15 = arith.constant dense<0.000000e+00> : vector<24xf32>
    %47 = vector.multi_reduction <add>, %46, %cst_15 [1] : vector<24x32xf32> to vector<24xf32>
    %48 = vector.shape_cast %47 : vector<24xf32> to vector<24x1xf32>
    %cst_16 = arith.constant 3.200000e+01 : f32
    %49 = vector.broadcast %cst_16 : f32 to vector<24x1xf32>
    %50 = arith.divf %48, %49 : vector<24x1xf32>
    %51 = vector.broadcast %50 : vector<24x1xf32> to vector<24x32xf32>
    %52 = arith.subf %46, %51 : vector<24x32xf32>
    %53 = arith.mulf %52, %52 : vector<24x32xf32>
    %cst_17 = arith.constant dense<0.000000e+00> : vector<24xf32>
    %54 = vector.multi_reduction <add>, %53, %cst_17 [1] : vector<24x32xf32> to vector<24xf32>
    %55 = vector.shape_cast %54 : vector<24xf32> to vector<24x1xf32>
    %cst_18 = arith.constant 3.200000e+01 : f32
    %56 = vector.broadcast %cst_18 : f32 to vector<24x1xf32>
    %57 = arith.divf %55, %56 : vector<24x1xf32>
    %58 = vector.broadcast %50 : vector<24x1xf32> to vector<24x32xf32>
    %59 = arith.subf %46, %58 : vector<24x32xf32>
    %cst_19 = arith.constant 9.99999974E-6 : f32
    %60 = vector.broadcast %cst_19 : f32 to vector<24x1xf32>
    %61 = arith.addf %57, %60 : vector<24x1xf32>
    %62 = math.rsqrt %61 : vector<24x1xf32>
    %63 = vector.broadcast %62 : vector<24x1xf32> to vector<24x32xf32>
    %64 = arith.mulf %59, %63 : vector<24x32xf32>
    %65 = vector.broadcast %9 : vector<1x32xf32> to vector<24x32xf32>
    %66 = arith.mulf %64, %65 : vector<24x32xf32>
    %67 = vector.broadcast %10 : vector<1x32xf32> to vector<24x32xf32>
    %68 = arith.addf %66, %67 : vector<24x32xf32>
    %69 = arith.addf %11, %68 : vector<24x32xf32>
    %c0_20 = arith.constant 0 : index
    %c0_21 = arith.constant 0 : index
    %c0_22 = arith.constant 0 : index
    %70 = vector.load %arg10[%c0_20, %c0_21, %c0_22] : memref<1x1x32xf32, #tpu.memory_space<vmem>>, vector<1x1x32xf32>
    %71 = vector.shape_cast %70 : vector<1x1x32xf32> to vector<1x32xf32>
    %cst_23 = arith.constant dense<0.000000e+00> : vector<24xf32>
    %72 = vector.multi_reduction <add>, %69, %cst_23 [1] : vector<24x32xf32> to vector<24xf32>
    %73 = vector.shape_cast %72 : vector<24xf32> to vector<24x1xf32>
    %cst_24 = arith.constant 3.200000e+01 : f32
    %74 = vector.broadcast %cst_24 : f32 to vector<24x1xf32>
    %75 = arith.divf %73, %74 : vector<24x1xf32>
    %76 = vector.broadcast %75 : vector<24x1xf32> to vector<24x32xf32>
    %77 = arith.subf %69, %76 : vector<24x32xf32>
    %78 = arith.mulf %77, %77 : vector<24x32xf32>
    %cst_25 = arith.constant dense<0.000000e+00> : vector<24xf32>
    %79 = vector.multi_reduction <add>, %78, %cst_25 [1] : vector<24x32xf32> to vector<24xf32>
    %80 = vector.shape_cast %79 : vector<24xf32> to vector<24x1xf32>
    %cst_26 = arith.constant 3.200000e+01 : f32
    %81 = vector.broadcast %cst_26 : f32 to vector<24x1xf32>
    %82 = arith.divf %80, %81 : vector<24x1xf32>
    %83 = vector.broadcast %75 : vector<24x1xf32> to vector<24x32xf32>
    %84 = arith.subf %69, %83 : vector<24x32xf32>
    %cst_27 = arith.constant 9.99999974E-6 : f32
    %85 = vector.broadcast %cst_27 : f32 to vector<24x1xf32>
    %86 = arith.addf %82, %85 : vector<24x1xf32>
    %87 = math.rsqrt %86 : vector<24x1xf32>
    %88 = vector.broadcast %87 : vector<24x1xf32> to vector<24x32xf32>
    %89 = arith.mulf %84, %88 : vector<24x32xf32>
    %90 = vector.broadcast %71 : vector<1x32xf32> to vector<24x32xf32>
    %91 = arith.mulf %89, %90 : vector<24x32xf32>
    %cst_28 = arith.constant 0.000000e+00 : f32
    %92 = vector.broadcast %cst_28 : f32 to vector<24x32xf32>
    %93 = arith.addf %91, %92 : vector<24x32xf32>
    %94 = arith.truncf %93 : vector<24x32xf32> to vector<24x32xbf16>
    %c0_29 = arith.constant 0 : index
    %c0_30 = arith.constant 0 : index
    %c0_31 = arith.constant 0 : index
    %95 = vector.load %arg11[%c0_29, %c0_30, %c0_31] : memref<1x32x128xbf16, #tpu.memory_space<vmem>>, vector<1x32x128xbf16>
    %96 = vector.shape_cast %95 : vector<1x32x128xbf16> to vector<32x128xbf16>
    %cst_32 = arith.constant dense<0.000000e+00> : vector<24x128xf32>
    %97 = tpu.matmul %94, %96, %cst_32 {dimension_numbers = #tpu.dot_dimension_numbers<[1], [0], [0], [1], [0, 0, 1, 1], [], []>} : vector<24x32xbf16>, vector<32x128xbf16>, vector<24x128xf32> -> vector<24x128xf32>
    %cst_33 = arith.constant 5.000000e-01 : f32
    %98 = vector.broadcast %cst_33 : f32 to vector<24x128xf32>
    %99 = arith.mulf %98, %97 : vector<24x128xf32>
    %cst_34 = arith.constant 4.471500e-02 : f32
    %100 = vector.broadcast %cst_34 : f32 to vector<24x128xf32>
    %101 = arith.mulf %100, %97 : vector<24x128xf32>
    %102 = arith.mulf %101, %97 : vector<24x128xf32>
    %103 = arith.mulf %102, %97 : vector<24x128xf32>
    %104 = arith.addf %97, %103 : vector<24x128xf32>
    %cst_35 = arith.constant 0.797884583 : f32
    %105 = vector.broadcast %cst_35 : f32 to vector<24x128xf32>
    %106 = arith.mulf %105, %104 : vector<24x128xf32>
    %107 = math.tanh %106 : vector<24x128xf32>
    %cst_36 = arith.constant 1.000000e+00 : f32
    %108 = vector.broadcast %cst_36 : f32 to vector<24x128xf32>
    %109 = arith.addf %108, %107 : vector<24x128xf32>
    %110 = arith.mulf %99, %109 : vector<24x128xf32>
    %c0_37 = arith.constant 0 : index
    %c0_38 = arith.constant 0 : index
    %c0_39 = arith.constant 0 : index
    %111 = vector.load %arg12[%c0_37, %c0_38, %c0_39] : memref<1x1x128xf32, #tpu.memory_space<vmem>>, vector<1x1x128xf32>
    %112 = vector.shape_cast %111 : vector<1x1x128xf32> to vector<1x128xf32>
    %cst_40 = arith.constant dense<0.000000e+00> : vector<24xf32>
    %113 = vector.multi_reduction <add>, %110, %cst_40 [1] : vector<24x128xf32> to vector<24xf32>
    %114 = vector.shape_cast %113 : vector<24xf32> to vector<24x1xf32>
    %cst_41 = arith.constant 1.280000e+02 : f32
    %115 = vector.broadcast %cst_41 : f32 to vector<24x1xf32>
    %116 = arith.divf %114, %115 : vector<24x1xf32>
    %117 = vector.broadcast %116 : vector<24x1xf32> to vector<24x128xf32>
    %118 = arith.subf %110, %117 : vector<24x128xf32>
    %119 = arith.mulf %118, %118 : vector<24x128xf32>
    %cst_42 = arith.constant dense<0.000000e+00> : vector<24xf32>
    %120 = vector.multi_reduction <add>, %119, %cst_42 [1] : vector<24x128xf32> to vector<24xf32>
    %121 = vector.shape_cast %120 : vector<24xf32> to vector<24x1xf32>
    %cst_43 = arith.constant 1.280000e+02 : f32
    %122 = vector.broadcast %cst_43 : f32 to vector<24x1xf32>
    %123 = arith.divf %121, %122 : vector<24x1xf32>
    %124 = vector.broadcast %116 : vector<24x1xf32> to vector<24x128xf32>
    %125 = arith.subf %110, %124 : vector<24x128xf32>
    %cst_44 = arith.constant 9.99999974E-6 : f32
    %126 = vector.broadcast %cst_44 : f32 to vector<24x1xf32>
    %127 = arith.addf %123, %126 : vector<24x1xf32>
    %128 = math.rsqrt %127 : vector<24x1xf32>
    %129 = vector.broadcast %128 : vector<24x1xf32> to vector<24x128xf32>
    %130 = arith.mulf %125, %129 : vector<24x128xf32>
    %131 = vector.broadcast %112 : vector<1x128xf32> to vector<24x128xf32>
    %132 = arith.mulf %130, %131 : vector<24x128xf32>
    %cst_45 = arith.constant 0.000000e+00 : f32
    %133 = vector.broadcast %cst_45 : f32 to vector<24x128xf32>
    %134 = arith.addf %132, %133 : vector<24x128xf32>
    %135 = arith.truncf %134 : vector<24x128xf32> to vector<24x128xbf16>
    %c0_46 = arith.constant 0 : index
    %c0_47 = arith.constant 0 : index
    %c0_48 = arith.constant 0 : index
    %136 = vector.load %arg13[%c0_46, %c0_47, %c0_48] : memref<1x128x32xbf16, #tpu.memory_space<vmem>>, vector<1x128x32xbf16>
    %137 = vector.shape_cast %136 : vector<1x128x32xbf16> to vector<128x32xbf16>
    %cst_49 = arith.constant dense<0.000000e+00> : vector<24x32xf32>
    %138 = tpu.matmul %135, %137, %cst_49 {dimension_numbers = #tpu.dot_dimension_numbers<[1], [0], [0], [1], [0, 0, 1, 1], [], []>} : vector<24x128xbf16>, vector<128x32xbf16>, vector<24x32xf32> -> vector<24x32xf32>
    %139 = arith.addf %69, %138 : vector<24x32xf32>
    %c0_50 = arith.constant 0 : index
    %c0_51 = arith.constant 0 : index
    %140 = vector.load %arg16[%c0_50, %c0_51] : memref<24x32xf32, #tpu.memory_space<vmem>>, vector<24x32xf32>
    tpu.vector_store %arg16[%c0_50, %c0_51], %139 {strides = array<i32>} : memref<24x32xf32, #tpu.memory_space<vmem>>, vector<24x32xf32>,
    %c1_i32_52 = arith.constant 1 : i32
    %141 = arith.cmpi eq, %arg1, %c1_i32_52 : i32
    %142 = arith.extui %141 : i1 to i32
    %c0_i32_53 = arith.constant 0 : i32
    %143 = arith.cmpi ne, %142, %c0_i32_53 : i32
    scf.if %143 {
      %c0_54 = arith.constant 0 : index
      %c0_55 = arith.constant 0 : index
      %144 = vector.load %arg16[%c0_54, %c0_55] : memref<24x32xf32, #tpu.memory_space<vmem>>, vector<24x32xf32>
      %145 = vector.shape_cast %144 : vector<24x32xf32> to vector<2x12x32xf32>
      %c0_56 = arith.constant 0 : index
      %c0_57 = arith.constant 0 : index
      %c0_58 = arith.constant 0 : index
      %146 = vector.load %arg14[%c0_56, %c0_57, %c0_58] : memref<2x12x32xf32, #tpu.memory_space<vmem>>, vector<2x12x32xf32>
      tpu.vector_store %arg14[%c0_56, %c0_57, %c0_58], %145 {strides = array<i32>} : memref<2x12x32xf32, #tpu.memory_space<vmem>>, vector<2x12x32xf32>,
    } else {
    }
    return
  }
  func.func @transform_0(%arg0: i32, %arg1: i32) -> (i32, i32, i32) {
    %c0_i32 = arith.constant 0 : i32
    %c0_i32_0 = arith.constant 0 : i32
    %c0_i32_1 = arith.constant 0 : i32
    return %arg0, %c0_i32, %c0_i32_0 : i32, i32, i32
  }
  func.func @transform_1(%arg0: i32, %arg1: i32) -> (i32, i32, i32) {
    %c0_i32 = arith.constant 0 : i32
    %c0_i32_0 = arith.constant 0 : i32
    %c0_i32_1 = arith.constant 0 : i32
    return %arg0, %c0_i32, %c0_i32_0 : i32, i32, i32
  }
  func.func @transform_2(%arg0: i32, %arg1: i32) -> (i32, i32) {
    %c0_i32 = arith.constant 0 : i32
    %c0_i32_0 = arith.constant 0 : i32
    %c0_i32_1 = arith.constant 0 : i32
    return %c0_i32, %c0_i32_0 : i32, i32
  }
  func.func @transform_3(%arg0: i32, %arg1: i32) -> (i32, i32, i32, i32) {
    %c0_i32 = arith.constant 0 : i32
    %c0_i32_0 = arith.constant 0 : i32
    %c0_i32_1 = arith.constant 0 : i32
    %c0_i32_2 = arith.constant 0 : i32
    return %arg1, %c0_i32, %c0_i32_0, %c0_i32_1 : i32, i32, i32, i32
  }
  func.func @transform_4(%arg0: i32, %arg1: i32) -> (i32, i32, i32, i32) {
    %c0_i32 = arith.constant 0 : i32
    %c0_i32_0 = arith.constant 0 : i32
    %c0_i32_1 = arith.constant 0 : i32
    %c0_i32_2 = arith.constant 0 : i32
    return %arg1, %c0_i32, %c0_i32_0, %c0_i32_1 : i32, i32, i32, i32
  }
  func.func @transform_5(%arg0: i32, %arg1: i32) -> (i32, i32, i32, i32) {
    %c0_i32 = arith.constant 0 : i32
    %c0_i32_0 = arith.constant 0 : i32
    %c0_i32_1 = arith.constant 0 : i32
    %c0_i32_2 = arith.constant 0 : i32
    return %arg1, %c0_i32, %c0_i32_0, %c0_i32_1 : i32, i32, i32, i32
  }
  func.func @transform_6(%arg0: i32, %arg1: i32) -> (i32, i32, i32, i32) {
    %c0_i32 = arith.constant 0 : i32
    %c0_i32_0 = arith.constant 0 : i32
    %c0_i32_1 = arith.constant 0 : i32
    %c0_i32_2 = arith.constant 0 : i32
    return %arg1, %c0_i32, %c0_i32_0, %c0_i32_1 : i32, i32, i32, i32
  }
  func.func @transform_7(%arg0: i32, %arg1: i32) -> (i32, i32, i32) {
    %c0_i32 = arith.constant 0 : i32
    %c0_i32_0 = arith.constant 0 : i32
    %c0_i32_1 = arith.constant 0 : i32
    return %arg1, %c0_i32, %c0_i32_0 : i32, i32, i32
  }
  func.func @transform_8(%arg0: i32, %arg1: i32) -> (i32, i32, i32) {
    %c0_i32 = arith.constant 0 : i32
    %c0_i32_0 = arith.constant 0 : i32
    %c0_i32_1 = arith.constant 0 : i32
    return %arg1, %c0_i32, %c0_i32_0 : i32, i32, i32
  }
  func.func @transform_9(%arg0: i32, %arg1: i32) -> (i32, i32, i32) {
    %c0_i32 = arith.constant 0 : i32
    %c0_i32_0 = arith.constant 0 : i32
    %c0_i32_1 = arith.constant 0 : i32
    return %arg1, %c0_i32, %c0_i32_0 : i32, i32, i32
  }
  func.func @transform_10(%arg0: i32, %arg1: i32) -> (i32, i32, i32) {
    %c0_i32 = arith.constant 0 : i32
    %c0_i32_0 = arith.constant 0 : i32
    %c0_i32_1 = arith.constant 0 : i32
    return %arg1, %c0_i32, %c0_i32_0 : i32, i32, i32
  }
  func.func @transform_11(%arg0: i32, %arg1: i32) -> (i32, i32, i32) {
    %c0_i32 = arith.constant 0 : i32
    %c0_i32_0 = arith.constant 0 : i32
    %c0_i32_1 = arith.constant 0 : i32
    return %arg1, %c0_i32, %c0_i32_0 : i32, i32, i32
  }
  func.func @transform_12(%arg0: i32, %arg1: i32) -> (i32, i32, i32) {
    %c0_i32 = arith.constant 0 : i32
    %c0_i32_0 = arith.constant 0 : i32
    %c0_i32_1 = arith.constant 0 : i32
    return %arg0, %c0_i32, %c0_i32_0 : i32, i32, i32
  }
}

</mosaic_0001>

<llo_original>
// kernel: perceiver_resampler.1
$region0: #{perceiver_resampler.1}
  #allocation0 [shape = 'u32[]', space=smem, size = 0x4, offset = 0x4, fixed_abs, tag = 'smem constant byte address 0x4 - core index']
  #allocation1 [shape = 'u32[144,128]{1,0:T(1,128)}', space=vmem, size = 0x12000, scoped, tag = 'internal scratch']
  #allocation2 [shape = 'f32[16,32]{1,0:T(8,128)}', space=vmem, size = 0x2000, scoped, tag = 'scratch operand']
  #allocation3 [shape = 'f32[24,32]{1,0:T(8,128)}', space=vmem, size = 0x3000, scoped, tag = 'scratch operand']
  %s0 = inlined_call_operand.vmem [shape: f32[2,12,32], index: 0, kind: input, shape index: {}, may-alias: {0,12}]
  %s1 = inlined_call_operand.vmem [shape: bf16[2,8,32], index: 1, kind: input, shape index: {}]
  %s2 = inlined_call_operand.vmem [shape: f32[8,32], index: 2, kind: input, shape index: {}]
  %s3 = inlined_call_operand.vmem [shape: bf16[2,2,32,16], index: 3, kind: input, shape index: {}]
  %s4 = inlined_call_operand.vmem [shape: bf16[2,2,32,16], index: 4, kind: input, shape index: {}]
  %s5 = inlined_call_operand.vmem [shape: bf16[2,2,32,16], index: 5, kind: input, shape index: {}]
  %s6 = inlined_call_operand.vmem [shape: bf16[2,2,16,32], index: 6, kind: input, shape index: {}]
  %s7 = inlined_call_operand.vmem [shape: f32[2,6,32], index: 7, kind: input, shape index: {}]
  %s8 = inlined_call_operand.vmem [shape: f32[2,1,32], index: 8, kind: input, shape index: {}]
  %s9 = inlined_call_operand.vmem [shape: bf16[2,32,128], index: 9, kind: input, shape index: {}]
  %s10 = inlined_call_operand.vmem [shape: f32[2,1,128], index: 10, kind: input, shape index: {}]
  %s11 = inlined_call_operand.vmem [shape: bf16[2,128,32], index: 11, kind: input, shape index: {}]
  %s12 = inlined_call_operand.vmem [shape: f32[2,12,32], index: 12, kind: output, shape index: {}, may-alias: {0,12}]
  %s13 = sld [smem:[#allocation0]]
  $region96: #{perceiver_resampler.1} parent=0
    _
  %s15 = ssub.s32 1, %s13
  %s16 = scalar_select 0, %s15, %s13
  loop: start=0, step=1, limit=4
  $region2: #{perceiver_resampler.1} parent=0 // loop_pre_header
    _
  $region3: #{perceiver_resampler.1} parent=0 // loop_header
    %s18 = sphi 0, %s22
    %p19 = scmp.ge.s32.totalorder %s18, 4
    %s25 = sphi 0, %s37
    %s26 = sphi 0, %s33
    %s27 = sphi 0, %s25
    %s28 = sphi 0, %s26
    %s29 = sphi 0, %s27
    %s30 = sphi 0, %s28
    %s40 = sphi 0, %s42
    %s43 = sphi 0, %s40
    %s44 = sphi 0, %s43
    %s60 = sphi 0, %s44
    %s66 = sphi 0, %s68
    %s69 = sphi 0, %s66
    %s70 = sphi 0, %s69
    %s86 = sphi 0, %s70
    %s90 = sphi 0, %s90
    %s92 = sphi 0, %s90
    %s93 = sphi 0, %s92
    %s107 = sphi 0, %s93
    %s113 = sphi 0, %s115
    %s116 = sphi 0, %s113
    %s117 = sphi 0, %s116
    %s133 = sphi 0, %s117
    %s139 = sphi 0, %s141
    %s142 = sphi 0, %s139
    %s143 = sphi 0, %s142
    %s159 = sphi 0, %s143
    %s165 = sphi 0, %s167
    %s168 = sphi 0, %s165
    %s169 = sphi 0, %s168
    %s185 = sphi 0, %s169
    %s191 = sphi 0, %s193
    %s194 = sphi 0, %s191
    %s195 = sphi 0, %s194
    %s211 = sphi 0, %s195
    %s217 = sphi 0, %s219
    %s220 = sphi 0, %s217
    %s221 = sphi 0, %s220
    %s237 = sphi 0, %s221
    %s243 = sphi 0, %s245
    %s246 = sphi 0, %s243
    %s247 = sphi 0, %s246
    %s263 = sphi 0, %s247
    %s269 = sphi 0, %s271
    %s272 = sphi 0, %s269
    %s273 = sphi 0, %s272
    %s289 = sphi 0, %s273
    %s295 = sphi 0, %s297
    %s298 = sphi 0, %s295
    %s299 = sphi 0, %s298
    %s315 = sphi 0, %s299
    %s321 = sphi 0, %s323
    %s324 = sphi 0, %s321
    %s325 = sphi 0, %s324
    %s341 = sphi 0, %s325
    %s347 = sphi 0, %s349
    %s350 = sphi 0, %s347
    %s351 = sphi 0, %s350
    %s367 = sphi 0, %s351
  $region4: #{perceiver_resampler.1} parent=0 // loop_header_branch
    %21 = sbr.rel (%p19) target = $region8
  $region5: #{perceiver_resampler.1} parent=0 // loop_body
    %s23 = ssub.s32 %s18, 1
    %s24 = ssub.s32 %s18, 2
    %s31 = sadd.s32 1, %s26
    %p32 = scmp.ge.s32.totalorder %s31, 2
    %s33 = scalar_select %p32, 0, %s31
    %s34 = sadd.s32 1, %s25
    %s35 = scalar_select %p32, %s34, %s25
    %p36 = scmp.ge.s32.totalorder %s35, 1
    %s37 = scalar_select %p36, 0, %s35
    %s38 = ssub.s32 %s25, %s37
    %p39 = scmp.eq.s32.totalorder %s38, 0
    %s41 = sadd.s32 %s40, 1
    %s42 = scalar_select %p39, %s40, %s41
    %p45 = pneg %p39
    %p46 = scmp.eq.s32.totalorder %s18, 1
    %p47 = por %p45, %p46
    %p48 = scmp.ne.s32.totalorder %s40, %s43
    %p49 = scmp.eq.s32.totalorder %s18, 0
    %p50 = por %p48, %p49
    %p51 = scmp.ne.s32.totalorder %s40, %s43
    %p52 = scmp.eq.s32.totalorder %s23, 1
    %p53 = por %p51, %p52
    %p54 = scmp.ne.s32.totalorder %s43, %s44
    %p55 = scmp.eq.s32.totalorder %s23, 0
    %p56 = por %p54, %p55
    %p57 = scmp.ne.s32.totalorder %s43, %s44
    %p58 = scmp.eq.s32.totalorder %s24, 1
    %p59 = por %p57, %p58
    %p61 = scmp.ne.s32.totalorder %s44, %s60
    %p62 = scmp.eq.s32.totalorder %s24, 0
    %p63 = por %p61, %p62
    %s64 = ssub.s32 %s25, %s37
    %p65 = scmp.eq.s32.totalorder %s64, 0
    %s67 = sadd.s32 %s66, 1
    %s68 = scalar_select %p65, %s66, %s67
    %p71 = pneg %p65
    %p72 = scmp.eq.s32.totalorder %s18, 1
    %p73 = por %p71, %p72
    %p74 = scmp.ne.s32.totalorder %s66, %s69
    %p75 = scmp.eq.s32.totalorder %s18, 0
    %p76 = por %p74, %p75
    %p77 = scmp.ne.s32.totalorder %s66, %s69
    %p78 = scmp.eq.s32.totalorder %s23, 1
    %p79 = por %p77, %p78
    %p80 = scmp.ne.s32.totalorder %s69, %s70
    %p81 = scmp.eq.s32.totalorder %s23, 0
    %p82 = por %p80, %p81
    %p83 = scmp.ne.s32.totalorder %s69, %s70
    %p84 = scmp.eq.s32.totalorder %s24, 1
    %p85 = por %p83, %p84
    %p87 = scmp.ne.s32.totalorder %s70, %s86
    %p88 = scmp.eq.s32.totalorder %s24, 0
    %p89 = por %p87, %p88
    %s91 = sadd.s32 %s90, 1
    %p94 = scmp.eq.s32.totalorder %s18, 1
    %p95 = scmp.ne.s32.totalorder %s90, %s92
    %p96 = scmp.eq.s32.totalorder %s18, 0
    %p97 = por %p95, %p96
    %p98 = scmp.ne.s32.totalorder %s90, %s92
    %p99 = scmp.eq.s32.totalorder %s23, 1
    %p100 = por %p98, %p99
    %p101 = scmp.ne.s32.totalorder %s92, %s93
    %p102 = scmp.eq.s32.totalorder %s23, 0
    %p103 = por %p101, %p102
    %p104 = scmp.ne.s32.totalorder %s92, %s93
    %p105 = scmp.eq.s32.totalorder %s24, 1
    %p106 = por %p104, %p105
    %p108 = scmp.ne.s32.totalorder %s93, %s107
    %p109 = scmp.eq.s32.totalorder %s24, 0
    %p110 = por %p108, %p109
    %s111 = ssub.s32 %s26, %s33
    %p112 = scmp.eq.s32.totalorder %s111, 0
    %s114 = sadd.s32 %s113, 1
    %s115 = scalar_select %p112, %s113, %s114
    %p118 = pneg %p112
    %p119 = scmp.eq.s32.totalorder %s18, 1
    %p120 = por %p118, %p119
    %p121 = scmp.ne.s32.totalorder %s113, %s116
    %p122 = scmp.eq.s32.totalorder %s18, 0
    %p123 = por %p121, %p122
    %p124 = scmp.ne.s32.totalorder %s113, %s116
    %p125 = scmp.eq.s32.totalorder %s23, 1
    %p126 = por %p124, %p125
    %p127 = scmp.ne.s32.totalorder %s116, %s117
    %p128 = scmp.eq.s32.totalorder %s23, 0
    %p129 = por %p127, %p128
    %p130 = scmp.ne.s32.totalorder %s116, %s117
    %p131 = scmp.eq.s32.totalorder %s24, 1
    %p132 = por %p130, %p131
    %p134 = scmp.ne.s32.totalorder %s117, %s133
    %p135 = scmp.eq.s32.totalorder %s24, 0
    %p136 = por %p134, %p135
    %s137 = ssub.s32 %s26, %s33
    %p138 = scmp.eq.s32.totalorder %s137, 0
    %s140 = sadd.s32 %s139, 1
    %s141 = scalar_select %p138, %s139, %s140
    %p144 = pneg %p138
    %p145 = scmp.eq.s32.totalorder %s18, 1
    %p146 = por %p144, %p145
    %p147 = scmp.ne.s32.totalorder %s139, %s142
    %p148 = scmp.eq.s32.totalorder %s18, 0
    %p149 = por %p147, %p148
    %p150 = scmp.ne.s32.totalorder %s139, %s142
    %p151 = scmp.eq.s32.totalorder %s23, 1
    %p152 = por %p150, %p151
    %p153 = scmp.ne.s32.totalorder %s142, %s143
    %p154 = scmp.eq.s32.totalorder %s23, 0
    %p155 = por %p153, %p154
    %p156 = scmp.ne.s32.totalorder %s142, %s143
    %p157 = scmp.eq.s32.totalorder %s24, 1
    %p158 = por %p156, %p157
    %p160 = scmp.ne.s32.totalorder %s143, %s159
    %p161 = scmp.eq.s32.totalorder %s24, 0
    %p162 = por %p160, %p161
    %s163 = ssub.s32 %s26, %s33
    %p164 = scmp.eq.s32.totalorder %s163, 0
    %s166 = sadd.s32 %s165, 1
    %s167 = scalar_select %p164, %s165, %s166
    %p170 = pneg %p164
    %p171 = scmp.eq.s32.totalorder %s18, 1
    %p172 = por %p170, %p171
    %p173 = scmp.ne.s32.totalorder %s165, %s168
    %p174 = scmp.eq.s32.totalorder %s18, 0
    %p175 = por %p173, %p174
    %p176 = scmp.ne.s32.totalorder %s165, %s168
    %p177 = scmp.eq.s32.totalorder %s23, 1
    %p178 = por %p176, %p177
    %p179 = scmp.ne.s32.totalorder %s168, %s169
    %p180 = scmp.eq.s32.totalorder %s23, 0
    %p181 = por %p179, %p180
    %p182 = scmp.ne.s32.totalorder %s168, %s169
    %p183 = scmp.eq.s32.totalorder %s24, 1
    %p184 = por %p182, %p183
    %p186 = scmp.ne.s32.totalorder %s169, %s185
    %p187 = scmp.eq.s32.totalorder %s24, 0
    %p188 = por %p186, %p187
    %s189 = ssub.s32 %s26, %s33
    %p190 = scmp.eq.s32.totalorder %s189, 0
    %s192 = sadd.s32 %s191, 1
    %s193 = scalar_select %p190, %s191, %s192
    %p196 = pneg %p190
    %p197 = scmp.eq.s32.totalorder %s18, 1
    %p198 = por %p196, %p197
    %p199 = scmp.ne.s32.totalorder %s191, %s194
    %p200 = scmp.eq.s32.totalorder %s18, 0
    %p201 = por %p199, %p200
    %p202 = scmp.ne.s32.totalorder %s191, %s194
    %p203 = scmp.eq.s32.totalorder %s23, 1
    %p204 = por %p202, %p203
    %p205 = scmp.ne.s32.totalorder %s194, %s195
    %p206 = scmp.eq.s32.totalorder %s23, 0
    %p207 = por %p205, %p206
    %p208 = scmp.ne.s32.totalorder %s194, %s195
    %p209 = scmp.eq.s32.totalorder %s24, 1
    %p210 = por %p208, %p209
    %p212 = scmp.ne.s32.totalorder %s195, %s211
    %p213 = scmp.eq.s32.totalorder %s24, 0
    %p214 = por %p212, %p213
    %s215 = ssub.s32 %s26, %s33
    %p216 = scmp.eq.s32.totalorder %s215, 0
    %s218 = sadd.s32 %s217, 1
    %s219 = scalar_select %p216, %s217, %s218
    %p222 = pneg %p216
    %p223 = scmp.eq.s32.totalorder %s18, 1
    %p224 = por %p222, %p223
    %p225 = scmp.ne.s32.totalorder %s217, %s220
    %p226 = scmp.eq.s32.totalorder %s18, 0
    %p227 = por %p225, %p226
    %p228 = scmp.ne.s32.totalorder %s217, %s220
    %p229 = scmp.eq.s32.totalorder %s23, 1
    %p230 = por %p228, %p229
    %p231 = scmp.ne.s32.totalorder %s220, %s221
    %p232 = scmp.eq.s32.totalorder %s23, 0
    %p233 = por %p231, %p232
    %p234 = scmp.ne.s32.totalorder %s220, %s221
    %p235 = scmp.eq.s32.totalorder %s24, 1
    %p236 = por %p234, %p235
    %p238 = scmp.ne.s32.totalorder %s221, %s237
    %p239 = scmp.eq.s32.totalorder %s24, 0
    %p240 = por %p238, %p239
    %s241 = ssub.s32 %s26, %s33
    %p242 = scmp.eq.s32.totalorder %s241, 0
    %s244 = sadd.s32 %s243, 1
    %s245 = scalar_select %p242, %s243, %s244
    %p248 = pneg %p242
    %p249 = scmp.eq.s32.totalorder %s18, 1
    %p250 = por %p248, %p249
    %p251 = scmp.ne.s32.totalorder %s243, %s246
    %p252 = scmp.eq.s32.totalorder %s18, 0
    %p253 = por %p251, %p252
    %p254 = scmp.ne.s32.totalorder %s243, %s246
    %p255 = scmp.eq.s32.totalorder %s23, 1
    %p256 = por %p254, %p255
    %p257 = scmp.ne.s32.totalorder %s246, %s247
    %p258 = scmp.eq.s32.totalorder %s23, 0
    %p259 = por %p257, %p258
    %p260 = scmp.ne.s32.totalorder %s246, %s247
    %p261 = scmp.eq.s32.totalorder %s24, 1
    %p262 = por %p260, %p261
    %p264 = scmp.ne.s32.totalorder %s247, %s263
    %p265 = scmp.eq.s32.totalorder %s24, 0
    %p266 = por %p264, %p265
    %s267 = ssub.s32 %s26, %s33
    %p268 = scmp.eq.s32.totalorder %s267, 0
    %s270 = sadd.s32 %s269, 1
    %s271 = scalar_select %p268, %s269, %s270
    %p274 = pneg %p268
    %p275 = scmp.eq.s32.totalorder %s18, 1
    %p276 = por %p274, %p275
    %p277 = scmp.ne.s32.totalorder %s269, %s272
    %p278 = scmp.eq.s32.totalorder %s18, 0
    %p279 = por %p277, %p278
    %p280 = scmp.ne.s32.totalorder %s269, %s272
    %p281 = scmp.eq.s32.totalorder %s23, 1
    %p282 = por %p280, %p281
    %p283 = scmp.ne.s32.totalorder %s272, %s273
    %p284 = scmp.eq.s32.totalorder %s23, 0
    %p285 = por %p283, %p284
    %p286 = scmp.ne.s32.totalorder %s272, %s273
    %p287 = scmp.eq.s32.totalorder %s24, 1
    %p288 = por %p286, %p287
    %p290 = scmp.ne.s32.totalorder %s273, %s289
    %p291 = scmp.eq.s32.totalorder %s24, 0
    %p292 = por %p290, %p291
    %s293 = ssub.s32 %s26, %s33
    %p294 = scmp.eq.s32.totalorder %s293, 0
    %s296 = sadd.s32 %s295, 1
    %s297 = scalar_select %p294, %s295, %s296
    %p300 = pneg %p294
    %p301 = scmp.eq.s32.totalorder %s18, 1
    %p302 = por %p300, %p301
    %p303 = scmp.ne.s32.totalorder %s295, %s298
    %p304 = scmp.eq.s32.totalorder %s18, 0
    %p305 = por %p303, %p304
    %p306 = scmp.ne.s32.totalorder %s295, %s298
    %p307 = scmp.eq.s32.totalorder %s23, 1
    %p308 = por %p306, %p307
    %p309 = scmp.ne.s32.totalorder %s298, %s299
    %p310 = scmp.eq.s32.totalorder %s23, 0
    %p311 = por %p309, %p310
    %p312 = scmp.ne.s32.totalorder %s298, %s299
    %p313 = scmp.eq.s32.totalorder %s24, 1
    %p314 = por %p312, %p313
    %p316 = scmp.ne.s32.totalorder %s299, %s315
    %p317 = scmp.eq.s32.totalorder %s24, 0
    %p318 = por %p316, %p317
    %s319 = ssub.s32 %s26, %s33
    %p320 = scmp.eq.s32.totalorder %s319, 0
    %s322 = sadd.s32 %s321, 1
    %s323 = scalar_select %p320, %s321, %s322
    %p326 = pneg %p320
    %p327 = scmp.eq.s32.totalorder %s18, 1
    %p328 = por %p326, %p327
    %p329 = scmp.ne.s32.totalorder %s321, %s324
    %p330 = scmp.eq.s32.totalorder %s18, 0
    %p331 = por %p329, %p330
    %p332 = scmp.ne.s32.totalorder %s321, %s324
    %p333 = scmp.eq.s32.totalorder %s23, 1
    %p334 = por %p332, %p333
    %p335 = scmp.ne.s32.totalorder %s324, %s325
    %p336 = scmp.eq.s32.totalorder %s23, 0
    %p337 = por %p335, %p336
    %p338 = scmp.ne.s32.totalorder %s324, %s325
    %p339 = scmp.eq.s32.totalorder %s24, 1
    %p340 = por %p338, %p339
    %p342 = scmp.ne.s32.totalorder %s325, %s341
    %p343 = scmp.eq.s32.totalorder %s24, 0
    %p344 = por %p342, %p343
    %s345 = ssub.s32 %s25, %s37
    %p346 = scmp.eq.s32.totalorder %s345, 0
    %s348 = sadd.s32 %s347, 1
    %s349 = scalar_select %p346, %s347, %s348
    %p352 = pneg %p346
    %p353 = scmp.eq.s32.totalorder %s18, 1
    %p354 = por %p352, %p353
    %p355 = scmp.ne.s32.totalorder %s347, %s350
    %p356 = scmp.eq.s32.totalorder %s18, 0
    %p357 = por %p355, %p356
    %p358 = scmp.ne.s32.totalorder %s347, %s350
    %p359 = scmp.eq.s32.totalorder %s23, 1
    %p360 = por %p358, %p359
    %p361 = scmp.ne.s32.totalorder %s350, %s351
    %p362 = scmp.eq.s32.totalorder %s23, 0
    %p363 = por %p361, %p362
    %p364 = scmp.ne.s32.totalorder %s350, %s351
    %p365 = scmp.eq.s32.totalorder %s24, 1
    %p366 = por %p364, %p365
    %p368 = scmp.ne.s32.totalorder %s351, %s367
    %p369 = scmp.eq.s32.totalorder %s24, 0
    %p370 = por %p368, %p369
    %p371 = scmp.le.s32.totalorder 1, %s18
    %p372 = scmp.lt.s32.totalorder %s18, 3
    %p373 = pnand %p371, %p372
    %p374 = pneg %p373
    // Predicated region
    $region9: #{perceiver_resampler.1} parent=5 // pred_check
      _
    $region10: #{perceiver_resampler.1} parent=5 // pred_check_branch
      %376 = sbr.rel (%p373) target = $region12
    $region11: #{perceiver_resampler.1} parent=5 // pred_region
      %s377 = ssub.s32 %s18, 1
      // Predicated region
      $region13: #{perceiver_resampler.1} parent=11 // pred_check
        %p378 = pneg %p56
      $region14: #{perceiver_resampler.1} parent=11 // pred_check_branch
        %380 = sbr.rel (%p378) target = $region16
      $region15: #{perceiver_resampler.1} parent=11 // pred_region
        %s381 = smul.u32 2, %s27
        %p382 = scmp.lt.s32.totalorder %s381, 1
        %s383 = scalar_select %p382, %s381, 1
        %s384 = smul.addr %s383, 2
        %s385 = smul.addr %s384, 8
        %s386 = scalar_lea.vmem %s0, %s385
        %s387 = smul.u32 2, %s27
      $region16: #{perceiver_resampler.1} parent=11 // pred_fallthru
        _
      // Predicated region
      $region17: #{perceiver_resampler.1} parent=11 // pred_check
        %p388 = pneg %p82
      $region18: #{perceiver_resampler.1} parent=11 // pred_check_branch
        %390 = sbr.rel (%p388) target = $region20
      $region19: #{perceiver_resampler.1} parent=11 // pred_region
        %s391 = smul.u32 2, %s27
        %p392 = scmp.lt.s32.totalorder %s391, 1
        %s393 = scalar_select %p392, %s391, 1
        %s394 = smul.addr %s393, 4
        %s395 = scalar_lea.vmem %s1, %s394
        %s396 = smul.u32 2, %s27
      $region20: #{perceiver_resampler.1} parent=11 // pred_fallthru
        _
      // Predicated region
      $region21: #{perceiver_resampler.1} parent=11 // pred_check
        %p397 = pneg %p103
      $region22: #{perceiver_resampler.1} parent=11 // pred_check_branch
        %399 = sbr.rel (%p397) target = $region24
      $region23: #{perceiver_resampler.1} parent=11 // pred_region
        _
      $region24: #{perceiver_resampler.1} parent=11 // pred_fallthru
        _
    $region12: #{perceiver_resampler.1} parent=5 // pred_fallthru
      _
    %p400 = scmp.lt.s32.totalorder %s18, 2
    // Predicated region
    $region25: #{perceiver_resampler.1} parent=5 // pred_check
      %p401 = pneg %p400
    $region26: #{perceiver_resampler.1} parent=5 // pred_check_branch
      %403 = sbr.rel (%p401) target = $region28
    $region27: #{perceiver_resampler.1} parent=5 // pred_region
      // Predicated region
      $region29: #{perceiver_resampler.1} parent=27 // pred_check
        %p404 = pneg %p123
      $region30: #{perceiver_resampler.1} parent=27 // pred_check_branch
        %406 = sbr.rel (%p404) target = $region32
      $region31: #{perceiver_resampler.1} parent=27 // pred_region
        %p407 = scmp.lt.s32.totalorder %s26, 1
        %s408 = scalar_select %p407, %s26, 1
        %s409 = smul.addr %s408, 8
        %s410 = smul.addr %s409, 4
        %s411 = scalar_lea.vmem %s3, %s410
      $region32: #{perceiver_resampler.1} parent=27 // pred_fallthru
        _
      // Predicated region
      $region33: #{perceiver_resampler.1} parent=27 // pred_check
        %p412 = pneg %p149
      $region34: #{perceiver_resampler.1} parent=27 // pred_check_branch
        %414 = sbr.rel (%p412) target = $region36
      $region35: #{perceiver_resampler.1} parent=27 // pred_region
        %p415 = scmp.lt.s32.totalorder %s26, 1
        %s416 = scalar_select %p415, %s26, 1
        %s417 = smul.addr %s416, 8
        %s418 = smul.addr %s417, 4
        %s419 = scalar_lea.vmem %s4, %s418
      $region36: #{perceiver_resampler.1} parent=27 // pred_fallthru
        _
      // Predicated region
      $region37: #{perceiver_resampler.1} parent=27 // pred_check
        %p420 = pneg %p175
      $region38: #{perceiver_resampler.1} parent=27 // pred_check_branch
        %422 = sbr.rel (%p420) target = $region40
      $region39: #{perceiver_resampler.1} parent=27 // pred_region
        %p423 = scmp.lt.s32.totalorder %s26, 1
        %s424 = scalar_select %p423, %s26, 1
        %s425 = smul.addr %s424, 8
        %s426 = smul.addr %s425, 4
        %s427 = scalar_lea.vmem %s5, %s426
      $region40: #{perceiver_resampler.1} parent=27 // pred_fallthru
        _
      // Predicated region
      $region41: #{perceiver_resampler.1} parent=27 // pred_check
        %p428 = pneg %p201
      $region42: #{perceiver_resampler.1} parent=27 // pred_check_branch
        %430 = sbr.rel (%p428) target = $region44
      $region43: #{perceiver_resampler.1} parent=27 // pred_region
        %p431 = scmp.lt.s32.totalorder %s26, 1
        %s432 = scalar_select %p431, %s26, 1
        %s433 = smul.addr %s432, 4
        %s434 = smul.addr %s433, 4
        %s435 = scalar_lea.vmem %s6, %s434
      $region44: #{perceiver_resampler.1} parent=27 // pred_fallthru
        _
      // Predicated region
      $region45: #{perceiver_resampler.1} parent=27 // pred_check
        %p436 = pneg %p227
      $region46: #{perceiver_resampler.1} parent=27 // pred_check_branch
        %438 = sbr.rel (%p436) target = $region48
      $region47: #{perceiver_resampler.1} parent=27 // pred_region
        %p439 = scmp.lt.s32.totalorder %s26, 1
        %s440 = scalar_select %p439, %s26, 1
        %s441 = smul.addr %s440, 8
        %s442 = scalar_lea.vmem %s7, %s441
      $region48: #{perceiver_resampler.1} parent=27 // pred_fallthru
        _
      // Predicated region
      $region49: #{perceiver_resampler.1} parent=27 // pred_check
        %p443 = pneg %p253
      $region50: #{perceiver_resampler.1} parent=27 // pred_check_branch
        %445 = sbr.rel (%p443) target = $region52
      $region51: #{perceiver_resampler.1} parent=27 // pred_region
        %p446 = scmp.lt.s32.totalorder %s26, 1
        %s447 = scalar_select %p446, %s26, 1
        %s448 = scalar_lea.vmem %s8, %s447
      $region52: #{perceiver_resampler.1} parent=27 // pred_fallthru
        _
      // Predicated region
      $region53: #{perceiver_resampler.1} parent=27 // pred_check
        %p449 = pneg %p279
      $region54: #{perceiver_resampler.1} parent=27 // pred_check_branch
        %451 = sbr.rel (%p449) target = $region56
      $region55: #{perceiver_resampler.1} parent=27 // pred_region
        %p452 = scmp.lt.s32.totalorder %s26, 1
        %s453 = scalar_select %p452, %s26, 1
        %s454 = smul.addr %s453, 4
        %s455 = smul.addr %s454, 4
        %s456 = scalar_lea.vmem %s9, %s455
      $region56: #{perceiver_resampler.1} parent=27 // pred_fallthru
        _
      // Predicated region
      $region57: #{perceiver_resampler.1} parent=27 // pred_check
        %p457 = pneg %p305
      $region58: #{perceiver_resampler.1} parent=27 // pred_check_branch
        %459 = sbr.rel (%p457) target = $region60
      $region59: #{perceiver_resampler.1} parent=27 // pred_region
        %p460 = scmp.lt.s32.totalorder %s26, 1
        %s461 = scalar_select %p460, %s26, 1
        %s462 = scalar_lea.vmem %s10, %s461
      $region60: #{perceiver_resampler.1} parent=27 // pred_fallthru
        _
      // Predicated region
      $region61: #{perceiver_resampler.1} parent=27 // pred_check
        %p463 = pneg %p331
      $region62: #{perceiver_resampler.1} parent=27 // pred_check_branch
        %465 = sbr.rel (%p463) target = $region64
      $region63: #{perceiver_resampler.1} parent=27 // pred_region
        %p466 = scmp.lt.s32.totalorder %s26, 1
        %s467 = scalar_select %p466, %s26, 1
        %s468 = smul.addr %s467, 16
        %s469 = smul.addr %s468, 4
        %s470 = scalar_lea.vmem %s11, %s469
      $region64: #{perceiver_resampler.1} parent=27 // pred_fallthru
        _
    $region28: #{perceiver_resampler.1} parent=5 // pred_fallthru
      _
    %p471 = scmp.le.s32.totalorder 1, %s18
    %p472 = scmp.lt.s32.totalorder %s18, 3
    %p473 = pnand %p471, %p472
    %p474 = pneg %p473
    // Predicated region
    $region65: #{perceiver_resampler.1} parent=5 // pred_check
      _
    $region66: #{perceiver_resampler.1} parent=5 // pred_check_branch
      %476 = sbr.rel (%p473) target = $region68
    $region67: #{perceiver_resampler.1} parent=5 // pred_region
      %s477 = ssub.s32 %s18, 1
      %s478 = smul.u32 2, %s27
      %p479 = scmp.lt.s32.totalorder %s478, 1
      %s480 = scalar_select %p479, %s478, 1
      %s481 = smul.addr %s480, 2
      %s482 = smul.addr %s481, 8
      %s483 = scalar_lea.vmem %s0, %s482
      %p484 = pneg %p56
      %p485 = pneg %p53
      %s486 = smul.u32 2, %s27
      %p487 = scmp.lt.s32.totalorder %s486, 1
      %s488 = scalar_select %p487, %s486, 1
      %s489 = smul.addr %s488, 4
      %s490 = scalar_lea.vmem %s1, %s489
      %p491 = pneg %p82
      %p492 = pneg %p79
      %p493 = pneg %p103
      %p494 = pneg %p100
      %p495 = scmp.lt.s32.totalorder %s28, 1
      %s496 = scalar_select %p495, %s28, 1
      %s497 = smul.addr %s496, 8
      %s498 = smul.addr %s497, 4
      %s499 = scalar_lea.vmem %s3, %s498
      %p500 = pneg %p129
      %p501 = pneg %p126
      %p502 = scmp.lt.s32.totalorder %s28, 1
      %s503 = scalar_select %p502, %s28, 1
      %s504 = smul.addr %s503, 8
      %s505 = smul.addr %s504, 4
      %s506 = scalar_lea.vmem %s4, %s505
      %p507 = pneg %p155
      %p508 = pneg %p152
      %p509 = scmp.lt.s32.totalorder %s28, 1
      %s510 = scalar_select %p509, %s28, 1
      %s511 = smul.addr %s510, 8
      %s512 = smul.addr %s511, 4
      %s513 = scalar_lea.vmem %s5, %s512
      %p514 = pneg %p181
      %p515 = pneg %p178
      %p516 = scmp.lt.s32.totalorder %s28, 1
      %s517 = scalar_select %p516, %s28, 1
      %s518 = smul.addr %s517, 4
      %s519 = smul.addr %s518, 4
      %s520 = scalar_lea.vmem %s6, %s519
      %p521 = pneg %p207
      %p522 = pneg %p204
      %p523 = scmp.lt.s32.totalorder %s28, 1
      %s524 = scalar_select %p523, %s28, 1
      %s525 = smul.addr %s524, 8
      %s526 = scalar_lea.vmem %s7, %s525
      %p527 = pneg %p233
      %p528 = pneg %p230
      %p529 = scmp.lt.s32.totalorder %s28, 1
      %s530 = scalar_select %p529, %s28, 1
      %s531 = scalar_lea.vmem %s8, %s530
      %p532 = pneg %p259
      %p533 = pneg %p256
      %p534 = scmp.lt.s32.totalorder %s28, 1
      %s535 = scalar_select %p534, %s28, 1
      %s536 = smul.addr %s535, 4
      %s537 = smul.addr %s536, 4
      %s538 = scalar_lea.vmem %s9, %s537
      %p539 = pneg %p285
      %p540 = pneg %p282
      %p541 = scmp.lt.s32.totalorder %s28, 1
      %s542 = scalar_select %p541, %s28, 1
      %s543 = scalar_lea.vmem %s10, %s542
      %p544 = pneg %p311
      %p545 = pneg %p308
      %p546 = scmp.lt.s32.totalorder %s28, 1
      %s547 = scalar_select %p546, %s28, 1
      %s548 = smul.addr %s547, 16
      %s549 = smul.addr %s548, 4
      %s550 = scalar_lea.vmem %s11, %s549
      %p551 = pneg %p337
      %p552 = pneg %p334
      %p553 = pneg %p363
      %p554 = pneg %p360
      %s555 = smul.u32 2, %s27
      %p556 = scmp.lt.s32.totalorder %s555, 1
      %s557 = scalar_select %p556, %s555, 1
      %s558 = smul.addr %s557, 2
      %s559 = smul.addr %s558, 8
      %s560 = scalar_lea.vmem %s12, %s559
      %s561 = smul.u32 2, %s27
      %p562 = scmp.lt.s32.totalorder %s561, 1
      %s563 = scalar_select %p562, %s561, 1
      %s564 = smul.addr %s563, 2
      %s565 = smul.addr %s564, 8
      %s566 = scalar_lea.vmem %s0, %s565
      %s567 = smul.u32 2, %s27
      %s568 = smul.u32 2, %s27
      %p569 = scmp.lt.s32.totalorder %s568, 1
      %s570 = scalar_select %p569, %s568, 1
      %s571 = smul.addr %s570, 4
      %s572 = scalar_lea.vmem %s1, %s571
      %s573 = smul.u32 2, %s27
      %p574 = scmp.lt.s32.totalorder %s28, 1
      %s575 = scalar_select %p574, %s28, 1
      %s576 = smul.addr %s575, 8
      %s577 = smul.addr %s576, 4
      %s578 = scalar_lea.vmem %s3, %s577
      %p579 = scmp.lt.s32.totalorder %s28, 1
      %s580 = scalar_select %p579, %s28, 1
      %s581 = smul.addr %s580, 8
      %s582 = smul.addr %s581, 4
      %s583 = scalar_lea.vmem %s4, %s582
      %p584 = scmp.lt.s32.totalorder %s28, 1
      %s585 = scalar_select %p584, %s28, 1
      %s586 = smul.addr %s585, 8
      %s587 = smul.addr %s586, 4
      %s588 = scalar_lea.vmem %s5, %s587
      %p589 = scmp.lt.s32.totalorder %s28, 1
      %s590 = scalar_select %p589, %s28, 1
      %s591 = smul.addr %s590, 4
      %s592 = smul.addr %s591, 4
      %s593 = scalar_lea.vmem %s6, %s592
      %p594 = scmp.lt.s32.totalorder %s28, 1
      %s595 = scalar_select %p594, %s28, 1
      %s596 = smul.addr %s595, 8
      %s597 = scalar_lea.vmem %s7, %s596
      %p598 = scmp.lt.s32.totalorder %s28, 1
      %s599 = scalar_select %p598, %s28, 1
      %s600 = scalar_lea.vmem %s8, %s599
      %p601 = scmp.lt.s32.totalorder %s28, 1
      %s602 = scalar_select %p601, %s28, 1
      %s603 = smul.addr %s602, 4
      %s604 = smul.addr %s603, 4
      %s605 = scalar_lea.vmem %s9, %s604
      %p606 = scmp.lt.s32.totalorder %s28, 1
      %s607 = scalar_select %p606, %s28, 1
      %s608 = scalar_lea.vmem %s10, %s607
      %p609 = scmp.lt.s32.totalorder %s28, 1
      %s610 = scalar_select %p609, %s28, 1
      %s611 = smul.addr %s610, 16
      %s612 = smul.addr %s611, 4
      %s613 = scalar_lea.vmem %s11, %s612
      %s614 = smul.u32 2, %s27
      %p615 = scmp.lt.s32.totalorder %s614, 1
      %s616 = scalar_select %p615, %s614, 1
      %s617 = smul.addr %s616, 2
      %s618 = smul.addr %s617, 8
      %s619 = scalar_lea.vmem %s12, %s618
      %s620 = smul.u32 2, %s27
      %p622 = scmp.eq.s32.totalorder %s28, 0
      // Predicated region
      $region69: #{perceiver_resampler.1} parent=67 // pred_check
        %p623 = pneg %p622
      $region70: #{perceiver_resampler.1} parent=67 // pred_check_branch
        %625 = sbr.rel (%p623) target = $region72
      $region71: #{perceiver_resampler.1} parent=67 // pred_region
        %v626 = vld [vmem:[%s572] sm:$0xf]
        %v627 = vld [vmem:[%s572 + $0x4] sm:$0xf]
        %v628 = vunpack.c.l.bf16 %v626
        %v629 = vunpack.c.l.bf16 %v627
        %v630 = vld [vmem:[%s2] sm:$0xff]
        %v631 = vadd.f32 %v628, %v630
        %v632 = vadd.f32 %v629, %v630
        %vm633 = vcmask 261120
        %v634 = vsel %vm633, %v631, 0.0
        %635 = vadd.xlane.f32.xlu0 %v634
        %v636 = vpop.xlane.xlu0 %635
        %v637 = vsel %vm633, %v632, 0.0
        %638 = vadd.xlane.f32.xlu0 %v637
        %v639 = vpop.xlane.xlu0 %638
        %v640 = vrcp.pop 32.0
        %v641 = vmul.f32 %v636, %v640
        %v642 = vmul.f32 %v639, %v640
        %v643 = vsub.f32 %v631, %v641
        %v644 = vsub.f32 %v632, %v642
        %v645 = vmul.f32 %v643, %v643
        %v646 = vmul.f32 %v644, %v644
        %v647 = vsel %vm633, %v645, 0.0
        %648 = vadd.xlane.f32.xlu0 %v647
        %v649 = vpop.xlane.xlu0 %648
        %v650 = vsel %vm633, %v646, 0.0
        %651 = vadd.xlane.f32.xlu0 %v650
        %v652 = vpop.xlane.xlu0 %651
        %v653 = vmul.f32 %v649, %v640
        %v654 = vmul.f32 %v652, %v640
        %v655 = vadd.f32 %v653, 1e-05
        %v656 = vadd.f32 %v654, 1e-05
        %v657 = vrsqrt.pop %v655
        %v658 = vrsqrt.pop %v656
        %v659 = vmul.f32 %v643, %v657
        %v660 = vmul.f32 %v644, %v658
        %661 = vst.msk [vmem:[#allocation2] sm:$0xff] %vm633, %v659
        %662 = vst.msk [vmem:[#allocation2 + $0x8] sm:$0xff] %vm633, %v660
        %v663 = vld [vmem:[%s566] sm:$0xff]
        %v664 = vld [vmem:[%s566 + $0x8] sm:$0xf]
        %v665 = vld [vmem:[%s566 + $0x10] sm:$0xff]
        %v666 = vld [vmem:[%s566 + $0x18] sm:$0xf]
        %v671 = vcombine.high %v663, %v663
        %v672 = vcombine.high %v665, %v665
        %v673 = vcombine.low %v663, %v671
        %v674 = vcombine.low %v664, %v665
        %v675 = vcombine.low %v672, %v666
        %679 = vst.msk [vmem:[#allocation3] sm:$0xff] %vm633, %v673
        %680 = vst.msk [vmem:[#allocation3 + $0x8] sm:$0xff] %vm633, %v674
        %681 = vst.msk [vmem:[#allocation3 + $0x10] sm:$0xff] %vm633, %v675
      $region72: #{perceiver_resampler.1} parent=67 // pred_fallthru
        _
      %v682 = vld [vmem:[%s597] sm:$0x3f]
      %v683 = vld [vmem:[#allocation3] sm:$0xff]
      %v684 = vld [vmem:[#allocation3 + $0x8] sm:$0xff]
      %v685 = vld [vmem:[#allocation3 + $0x10] sm:$0xff]
      %v686 = vld [vmem:[#allocation2] sm:$0xff]
      %v687 = vld [vmem:[#allocation2 + $0x8] sm:$0xff]
      %v688 = vlaneseq
      %v689 = vshrl.u32 %v688, 7
      %v690 = vsub.s32 0, %v689
      %v691 = vrot.slane %v682, %v690
      %v692 = vmul.f32 %v686, %v691
      %v693 = vmul.f32 %v687, %v691
      %v694 = vlaneseq
      %v695 = vshrl.u32 %v694, 7
      %v696 = vsub.s32 1, %v695
      %v697 = vrot.slane %v682, %v696
      %v698 = vadd.f32 %v692, %v697
      %v699 = vadd.f32 %v693, %v697
      %vm700 = vcmask 261120
      %v701 = vsel %vm700, %v683, 0.0
      %702 = vadd.xlane.f32.xlu0 %v701
      %v703 = vpop.xlane.xlu0 %702
      %v704 = vsel %vm700, %v684, 0.0
      %705 = vadd.xlane.f32.xlu0 %v704
      %v706 = vpop.xlane.xlu0 %705
      %v707 = vsel %vm700, %v685, 0.0
      %708 = vadd.xlane.f32.xlu0 %v707
      %v709 = vpop.xlane.xlu0 %708
      %v710 = vrcp.pop 32.0
      %v711 = vmul.f32 %v703, %v710
      %v712 = vmul.f32 %v706, %v710
      %v713 = vmul.f32 %v709, %v710
      %v714 = vsub.f32 %v683, %v711
      %v715 = vsub.f32 %v684, %v712
      %v716 = vsub.f32 %v685, %v713
      %v717 = vmul.f32 %v714, %v714
      %v718 = vmul.f32 %v715, %v715
      %v719 = vmul.f32 %v716, %v716
      %v720 = vsel %vm700, %v717, 0.0
      %721 = vadd.xlane.f32.xlu0 %v720
      %v722 = vpop.xlane.xlu0 %721
      %v723 = vsel %vm700, %v718, 0.0
      %724 = vadd.xlane.f32.xlu0 %v723
      %v725 = vpop.xlane.xlu0 %724
      %v726 = vsel %vm700, %v719, 0.0
      %727 = vadd.xlane.f32.xlu0 %v726
      %v728 = vpop.xlane.xlu0 %727
      %v729 = vmul.f32 %v722, %v710
      %v730 = vmul.f32 %v725, %v710
      %v731 = vmul.f32 %v728, %v710
      %v732 = vadd.f32 %v729, 1e-05
      %v733 = vadd.f32 %v730, 1e-05
      %v734 = vadd.f32 %v731, 1e-05
      %v735 = vrsqrt.pop %v732
      %v736 = vrsqrt.pop %v733
      %v737 = vrsqrt.pop %v734
      %v738 = vmul.f32 %v714, %v735
      %v739 = vmul.f32 %v715, %v736
      %v740 = vmul.f32 %v716, %v737
      %v741 = vlaneseq
      %v742 = vshrl.u32 %v741, 7
      %v743 = vsub.s32 2, %v742
      %v744 = vrot.slane %v682, %v743
      %v745 = vmul.f32 %v738, %v744
      %v746 = vmul.f32 %v739, %v744
      %v747 = vmul.f32 %v740, %v744
      %v748 = vlaneseq
      %v749 = vshrl.u32 %v748, 7
      %v750 = vsub.s32 3, %v749
      %v751 = vrot.slane %v682, %v750
      %v752 = vadd.f32 %v745, %v751
      %v753 = vadd.f32 %v746, %v751
      %v754 = vadd.f32 %v747, %v751
      %v755 = vpack.c.bf16 %v699, %v698
      %v756 = vpack.c.bf16 %v753, %v752
      %v757 = vpack.c.bf16 %v754, %v754
      %v758 = vmul.f32 %v752, 0.25
      %v759 = vmul.f32 %v753, 0.25
      %v760 = vmul.f32 %v754, 0.25
      %v761 = vpack.c.bf16 %v759, %v758
      %v762 = vpack.c.bf16 %v760, %v760
      loop: start=0, step=1, limit=2
      $region73: #{perceiver_resampler.1} parent=67 // loop_pre_header
        _
      $region74: #{perceiver_resampler.1} parent=67 // loop_header
        %s764 = sphi 0, %s768
        %p765 = scmp.ge.s32.totalorder %s764, 2
        %v769 = vphi 0.0, %v1917
        %v770 = vphi 0.0, %v1918
        %v771 = vphi 0.0, %v1919
      $region75: #{perceiver_resampler.1} parent=67 // loop_header_branch
        %767 = sbr.rel (%p765) target = $region79
      $region76: #{perceiver_resampler.1} parent=67 // loop_body
        %s772 = smul.u32 %s764, 4
        %s773 = smul.addr %s772, 4
        %s774 = scalar_lea.vmem %s578, %s773
        %v775 = vld [vmem:[%s774] sm:$0xf]
        %v776 = vld [vmem:[%s774 + $0x4] sm:$0xf]
        %v777 = vld [vmem:[%s774 + $0x8] sm:$0xf]
        %v778 = vld [vmem:[%s774 + $0xc] sm:$0xf]
        %s779 = smul.addr %s772, 4
        %s780 = scalar_lea.vmem %s583, %s779
        %v781 = vld [vmem:[%s780] sm:$0xf]
        %v782 = vld [vmem:[%s780 + $0x4] sm:$0xf]
        %v783 = vld [vmem:[%s780 + $0x8] sm:$0xf]
        %v784 = vld [vmem:[%s780 + $0xc] sm:$0xf]
        %s785 = smul.addr %s772, 4
        %s786 = scalar_lea.vmem %s588, %s785
        %v787 = vld [vmem:[%s786] sm:$0xf]
        %v788 = vld [vmem:[%s786 + $0x4] sm:$0xf]
        %v789 = vld [vmem:[%s786 + $0x8] sm:$0xf]
        %v790 = vld [vmem:[%s786 + $0xc] sm:$0xf]
        %s791 = smul.u32 %s764, 2
        %s792 = smul.addr %s791, 4
        %s793 = scalar_lea.vmem %s593, %s792
        %v794 = vld [vmem:[%s793] sm:$0xf]
        %v795 = vld [vmem:[%s793 + $0x4] sm:$0xf]
        %v800 = vunpack.c.l.b16 %v775
        %v801 = vunpack.c.l.b16 %v776
        %v802 = vunpack.c.l.b16 %v777
        %v803 = vunpack.c.l.b16 %v778
        %v804 = vpack.c.b16 %v801, %v800
        %v805 = vpack.c.b16 %v803, %v802
        %v809 = vsel %vm700, %v761, 0
        %v812 = vsel %vm700, %v762, 0
        %814 = vmatprep.subr.bf16.mxu0 0
        %815 = vmatpush1.bf16.msra.mxu0 0
        %816 = vmatprep.subr.bf16.mxu0 0
        %817 = vmatpush1.bf16.msra.mxu0 0
        %818 = vmatprep.subr.bf16.mxu0 0
        %819 = vmatpush1.bf16.msra.mxu0 0
        %820 = vmatprep.subr.bf16.mxu0 0
        %821 = vmatpush1.bf16.msra.mxu0 0
        %822 = vmatprep.subr.bf16.mxu0 0
        %823 = vmatpush1.bf16.msra.mxu0 0
        %824 = vmatprep.subr.bf16.mxu0 0
        %825 = vmatpush1.bf16.msra.mxu0 0
        %826 = vmatprep.subr.bf16.mxu0 0
        %827 = vmatpush1.bf16.msra.mxu0 %v805
        %828 = vmatprep.subr.bf16.mxu0 0
        %829 = vmatpush1.bf16.msra.mxu0 %v804
        %830 = vmatprep.subr.bf16.mxu0 0
        %831 = vmatpush2.bf16.msra.mxu0 0
        %832 = vmatprep.subr.bf16.mxu0 0
        %833 = vmatpush2.bf16.msra.mxu0 0
        %834 = vmatprep.subr.bf16.mxu0 0
        %835 = vmatpush2.bf16.msra.mxu0 0
        %836 = vmatprep.subr.bf16.mxu0 0
        %837 = vmatpush2.bf16.msra.mxu0 0
        %838 = vmatprep.subr.bf16.mxu0 0
        %839 = vmatpush2.bf16.msra.mxu0 0
        %840 = vmatprep.subr.bf16.mxu0 0
        %841 = vmatpush2.bf16.msra.mxu0 0
        %842 = vmatprep.subr.bf16.mxu0 0
        %843 = vmatpush2.bf16.msra.mxu0 0
        %844 = vmatprep.subr.bf16.mxu0 0
        %845 = vmatpush2.bf16.msra.mxu0 0
        %846 = vmatprep.mubr.bf16.mxu0 0
        %847 = vmatmul.mubr.bf16.gmra.mxu0 %v809
        %v848 = vpop.f32.mrf.mxu0
        %v849 = vadd.f32 0.0, %v848
        %v850 = vpop.f32.mrf.mxu0
        %v851 = vpop.f32.mrf.mxu0
        %v852 = vadd.f32 0.0, %v851
        %v853 = vpop.f32.mrf.mxu0
        %854 = vmatprep.mubr.bf16.mxu0 0
        %855 = vmatmul.mubr.bf16.gmra.mxu0 %v812
        %v856 = vpop.f32.mrf.mxu0
        %v857 = vadd.f32 0.0, %v856
        %v858 = vpop.f32.mrf.mxu0
        %v859 = vpop.f32.mrf.mxu0
        %v860 = vpop.f32.mrf.mxu0
        %861 = vdwg.mxu0
        %v865 = vcombine.high %v849, %v849
        %v866 = vcombine.high %v852, %v852
        %v867 = vcombine.high %v857, %v857
        %v872 = vunpack.c.l.b16 %v781
        %v873 = vunpack.c.l.b16 %v782
        %v874 = vunpack.c.l.b16 %v783
        %v875 = vunpack.c.l.b16 %v784
        %v876 = vpack.c.b16 %v873, %v872
        %v877 = vpack.c.b16 %v875, %v874
        %v881 = vsel %vm700, %v755, 0
        %883 = vmatprep.subr.bf16.mxu0 0
        %884 = vmatpush1.bf16.msra.mxu0 0
        %885 = vmatprep.subr.bf16.mxu0 0
        %886 = vmatpush1.bf16.msra.mxu0 0
        %887 = vmatprep.subr.bf16.mxu0 0
        %888 = vmatpush1.bf16.msra.mxu0 0
        %889 = vmatprep.subr.bf16.mxu0 0
        %890 = vmatpush1.bf16.msra.mxu0 0
        %891 = vmatprep.subr.bf16.mxu0 0
        %892 = vmatpush1.bf16.msra.mxu0 0
        %893 = vmatprep.subr.bf16.mxu0 0
        %894 = vmatpush1.bf16.msra.mxu0 0
        %895 = vmatprep.subr.bf16.mxu0 0
        %896 = vmatpush1.bf16.msra.mxu0 %v877
        %897 = vmatprep.subr.bf16.mxu0 0
        %898 = vmatpush1.bf16.msra.mxu0 %v876
        %899 = vmatprep.subr.bf16.mxu0 0
        %900 = vmatpush2.bf16.msra.mxu0 0
        %901 = vmatprep.subr.bf16.mxu0 0
        %902 = vmatpush2.bf16.msra.mxu0 0
        %903 = vmatprep.subr.bf16.mxu0 0
        %904 = vmatpush2.bf16.msra.mxu0 0
        %905 = vmatprep.subr.bf16.mxu0 0
        %906 = vmatpush2.bf16.msra.mxu0 0
        %907 = vmatprep.subr.bf16.mxu0 0
        %908 = vmatpush2.bf16.msra.mxu0 0
        %909 = vmatprep.subr.bf16.mxu0 0
        %910 = vmatpush2.bf16.msra.mxu0 0
        %911 = vmatprep.subr.bf16.mxu0 0
        %912 = vmatpush2.bf16.msra.mxu0 0
        %913 = vmatprep.subr.bf16.mxu0 0
        %914 = vmatpush2.bf16.msra.mxu0 0
        %915 = vmatprep.mubr.bf16.mxu0 0
        %916 = vmatmul.mubr.bf16.gmra.mxu0 %v881
        %v917 = vpop.f32.mrf.mxu0
        %v918 = vadd.f32 0.0, %v917
        %v919 = vpop.f32.mrf.mxu0
        %v920 = vpop.f32.mrf.mxu0
        %v921 = vadd.f32 0.0, %v920
        %v922 = vpop.f32.mrf.mxu0
        %923 = vdwg.mxu0
        %v928 = vunpack.c.l.b16 %v787
        %v929 = vunpack.c.l.b16 %v788
        %v930 = vunpack.c.l.b16 %v789
        %v931 = vunpack.c.l.b16 %v790
        %v932 = vpack.c.b16 %v929, %v928
        %v933 = vpack.c.b16 %v931, %v930
        %936 = vmatprep.subr.bf16.mxu0 0
        %937 = vmatpush1.bf16.msra.mxu0 0
        %938 = vmatprep.subr.bf16.mxu0 0
        %939 = vmatpush1.bf16.msra.mxu0 0
        %940 = vmatprep.subr.bf16.mxu0 0
        %941 = vmatpush1.bf16.msra.mxu0 0
        %942 = vmatprep.subr.bf16.mxu0 0
        %943 = vmatpush1.bf16.msra.mxu0 0
        %944 = vmatprep.subr.bf16.mxu0 0
        %945 = vmatpush1.bf16.msra.mxu0 0
        %946 = vmatprep.subr.bf16.mxu0 0
        %947 = vmatpush1.bf16.msra.mxu0 0
        %948 = vmatprep.subr.bf16.mxu0 0
        %949 = vmatpush1.bf16.msra.mxu0 %v933
        %950 = vmatprep.subr.bf16.mxu0 0
        %951 = vmatpush1.bf16.msra.mxu0 %v932
        %952 = vmatprep.subr.bf16.mxu0 0
        %953 = vmatpush2.bf16.msra.mxu0 0
        %954 = vmatprep.subr.bf16.mxu0 0
        %955 = vmatpush2.bf16.msra.mxu0 0
        %956 = vmatprep.subr.bf16.mxu0 0
        %957 = vmatpush2.bf16.msra.mxu0 0
        %958 = vmatprep.subr.bf16.mxu0 0
        %959 = vmatpush2.bf16.msra.mxu0 0
        %960 = vmatprep.subr.bf16.mxu0 0
        %961 = vmatpush2.bf16.msra.mxu0 0
        %962 = vmatprep.subr.bf16.mxu0 0
        %963 = vmatpush2.bf16.msra.mxu0 0
        %964 = vmatprep.subr.bf16.mxu0 0
        %965 = vmatpush2.bf16.msra.mxu0 0
        %966 = vmatprep.subr.bf16.mxu0 0
        %967 = vmatpush2.bf16.msra.mxu0 0
        %968 = vmatprep.mubr.bf16.mxu0 0
        %969 = vmatmul.mubr.bf16.gmra.mxu0 %v881
        %v970 = vpop.f32.mrf.mxu0
        %v971 = vadd.f32 0.0, %v970
        %v972 = vpop.f32.mrf.mxu0
        %v973 = vpop.f32.mrf.mxu0
        %v974 = vadd.f32 0.0, %v973
        %v975 = vpop.f32.mrf.mxu0
        %976 = vdwg.mxu0
        %v978 = vsel %vm700, %v756, 0
        %v981 = vsel %vm700, %v757, 0
        %983 = vmatprep.subr.bf16.mxu0 0
        %984 = vmatpush1.bf16.msra.mxu0 0
        %985 = vmatprep.subr.bf16.mxu0 0
        %986 = vmatpush1.bf16.msra.mxu0 0
        %987 = vmatprep.subr.bf16.mxu0 0
        %988 = vmatpush1.bf16.msra.mxu0 0
        %989 = vmatprep.subr.bf16.mxu0 0
        %990 = vmatpush1.bf16.msra.mxu0 0
        %991 = vmatprep.subr.bf16.mxu0 0
        %992 = vmatpush1.bf16.msra.mxu0 0
        %993 = vmatprep.subr.bf16.mxu0 0
        %994 = vmatpush1.bf16.msra.mxu0 0
        %995 = vmatprep.subr.bf16.mxu0 0
        %996 = vmatpush1.bf16.msra.mxu0 %v877
        %997 = vmatprep.subr.bf16.mxu0 0
        %998 = vmatpush1.bf16.msra.mxu0 %v876
        %999 = vmatprep.subr.bf16.mxu0 0
        %1000 = vmatpush2.bf16.msra.mxu0 0
        %1001 = vmatprep.subr.bf16.mxu0 0
        %1002 = vmatpush2.bf16.msra.mxu0 0
        %1003 = vmatprep.subr.bf16.mxu0 0
        %1004 = vmatpush2.bf16.msra.mxu0 0
        %1005 = vmatprep.subr.bf16.mxu0 0
        %1006 = vmatpush2.bf16.msra.mxu0 0
        %1007 = vmatprep.subr.bf16.mxu0 0
        %1008 = vmatpush2.bf16.msra.mxu0 0
        %1009 = vmatprep.subr.bf16.mxu0 0
        %1010 = vmatpush2.bf16.msra.mxu0 0
        %1011 = vmatprep.subr.bf16.mxu0 0
        %1012 = vmatpush2.bf16.msra.mxu0 0
        %1013 = vmatprep.subr.bf16.mxu0 0
        %1014 = vmatpush2.bf16.msra.mxu0 0
        %1015 = vmatprep.mubr.bf16.mxu0 0
        %1016 = vmatmul.mubr.bf16.gmra.mxu0 %v978
        %v1017 = vpop.f32.mrf.mxu0
        %v1018 = vadd.f32 0.0, %v1017
        %v1019 = vpop.f32.mrf.mxu0
        %v1020 = vpop.f32.mrf.mxu0
        %v1021 = vadd.f32 0.0, %v1020
        %v1022 = vpop.f32.mrf.mxu0
        %1023 = vmatprep.mubr.bf16.mxu0 0
        %1024 = vmatmul.mubr.bf16.gmra.mxu0 %v981
        %v1025 = vpop.f32.mrf.mxu0
        %v1026 = vadd.f32 0.0, %v1025
        %v1027 = vpop.f32.mrf.mxu0
        %v1028 = vpop.f32.mrf.mxu0
        %v1029 = vpop.f32.mrf.mxu0
        %1030 = vdwg.mxu0
        %v1034 = vcombine.high %v1018, %v1018
        %v1035 = vcombine.high %v1021, %v1021
        %v1036 = vcombine.high %v1026, %v1026
        %1037 = vmatprep.subr.bf16.mxu0 0
        %1038 = vmatpush1.bf16.msra.mxu0 0
        %1039 = vmatprep.subr.bf16.mxu0 0
        %1040 = vmatpush1.bf16.msra.mxu0 0
        %1041 = vmatprep.subr.bf16.mxu0 0
        %1042 = vmatpush1.bf16.msra.mxu0 0
        %1043 = vmatprep.subr.bf16.mxu0 0
        %1044 = vmatpush1.bf16.msra.mxu0 0
        %1045 = vmatprep.subr.bf16.mxu0 0
        %1046 = vmatpush1.bf16.msra.mxu0 0
        %1047 = vmatprep.subr.bf16.mxu0 0
        %1048 = vmatpush1.bf16.msra.mxu0 0
        %1049 = vmatprep.subr.bf16.mxu0 0
        %1050 = vmatpush1.bf16.msra.mxu0 %v933
        %1051 = vmatprep.subr.bf16.mxu0 0
        %1052 = vmatpush1.bf16.msra.mxu0 %v932
        %1053 = vmatprep.subr.bf16.mxu0 0
        %1054 = vmatpush2.bf16.msra.mxu0 0
        %1055 = vmatprep.subr.bf16.mxu0 0
        %1056 = vmatpush2.bf16.msra.mxu0 0
        %1057 = vmatprep.subr.bf16.mxu0 0
        %1058 = vmatpush2.bf16.msra.mxu0 0
        %1059 = vmatprep.subr.bf16.mxu0 0
        %1060 = vmatpush2.bf16.msra.mxu0 0
        %1061 = vmatprep.subr.bf16.mxu0 0
        %1062 = vmatpush2.bf16.msra.mxu0 0
        %1063 = vmatprep.subr.bf16.mxu0 0
        %1064 = vmatpush2.bf16.msra.mxu0 0
        %1065 = vmatprep.subr.bf16.mxu0 0
        %1066 = vmatpush2.bf16.msra.mxu0 0
        %1067 = vmatprep.subr.bf16.mxu0 0
        %1068 = vmatpush2.bf16.msra.mxu0 0
        %1069 = vmatprep.mubr.bf16.mxu0 0
        %1070 = vmatmul.mubr.bf16.gmra.mxu0 %v978
        %v1071 = vpop.f32.mrf.mxu0
        %v1072 = vadd.f32 0.0, %v1071
        %v1073 = vpop.f32.mrf.mxu0
        %v1074 = vpop.f32.mrf.mxu0
        %v1075 = vadd.f32 0.0, %v1074
        %v1076 = vpop.f32.mrf.mxu0
        %1077 = vmatprep.mubr.bf16.mxu0 0
        %1078 = vmatmul.mubr.bf16.gmra.mxu0 %v981
        %v1079 = vpop.f32.mrf.mxu0
        %v1080 = vadd.f32 0.0, %v1079
        %v1081 = vpop.f32.mrf.mxu0
        %v1082 = vpop.f32.mrf.mxu0
        %v1083 = vpop.f32.mrf.mxu0
        %1084 = vdwg.mxu0
        %v1088 = vcombine.high %v1072, %v1072
        %v1089 = vcombine.high %v1075, %v1075
        %v1090 = vcombine.high %v1080, %v1080
        %v1091 = vcombine.low %v849, %v865
        %vm1092 = vcmask 130048
        %v1093 = vsel %vm1092, %v1091, 0
        %v1095 = vsel %vm1092, %v852, 0
        %v1098 = vsel %vm1092, %v918, 0
        %1100 = vmatprep.subr.mxu0 0.0
        %1101 = vmatpush1.xpose.msra.mxu0 0.0
        %1102 = vmatprep.subr.mxu0 0.0
        %1103 = vmatpush1.xpose.msra.mxu0 0.0
        %1104 = vmatprep.subr.mxu0 0.0
        %1105 = vmatpush1.xpose.msra.mxu0 0.0
        %1106 = vmatprep.subr.mxu0 0.0
        %1107 = vmatpush1.xpose.msra.mxu0 0.0
        %1108 = vmatprep.subr.mxu0 0.0
        %1109 = vmatpush1.xpose.msra.mxu0 0.0
        %1110 = vmatprep.subr.mxu0 0.0
        %1111 = vmatpush1.xpose.msra.mxu0 0.0
        %1112 = vmatprep.subr.mxu0 0.0
        %1113 = vmatpush1.xpose.msra.mxu0 0.0
        %1114 = vmatprep.subr.mxu0 0.0
        %1115 = vmatpush1.xpose.msra.mxu0 0.0
        %1116 = vmatprep.subr.mxu0 0.0
        %1117 = vmatpush1.xpose.msra.mxu0 0.0
        %1118 = vmatprep.subr.mxu0 0.0
        %1119 = vmatpush1.xpose.msra.mxu0 0.0
        %1120 = vmatprep.subr.mxu0 0.0
        %1121 = vmatpush1.xpose.msra.mxu0 0.0
        %1122 = vmatprep.subr.mxu0 0.0
        %1123 = vmatpush1.xpose.msra.mxu0 0.0
        %1124 = vmatprep.subr.mxu0 0.0
        %1125 = vmatpush1.xpose.msra.mxu0 0.0
        %1126 = vmatprep.subr.mxu0 0.0
        %1127 = vmatpush1.xpose.msra.mxu0 0.0
        %1128 = vmatprep.subr.mxu0 0.0
        %1129 = vmatpush1.xpose.msra.mxu0 0.0
        %1130 = vmatprep.subr.mxu0 0.0
        %1131 = vmatpush1.xpose.msra.mxu0 %v1098
        %1132 = vmatprep.subr.mxu0 0.0
        %1133 = vmatpush2.xpose.msra.mxu0 0.0
        %1134 = vmatprep.subr.mxu0 0.0
        %1135 = vmatpush2.xpose.msra.mxu0 0.0
        %1136 = vmatprep.subr.mxu0 0.0
        %1137 = vmatpush2.xpose.msra.mxu0 0.0
        %1138 = vmatprep.subr.mxu0 0.0
        %1139 = vmatpush2.xpose.msra.mxu0 0.0
        %1140 = vmatprep.subr.mxu0 0.0
        %1141 = vmatpush2.xpose.msra.mxu0 0.0
        %1142 = vmatprep.subr.mxu0 0.0
        %1143 = vmatpush2.xpose.msra.mxu0 0.0
        %1144 = vmatprep.subr.mxu0 0.0
        %1145 = vmatpush2.xpose.msra.mxu0 0.0
        %1146 = vmatprep.subr.mxu0 0.0
        %1147 = vmatpush2.xpose.msra.mxu0 0.0
        %1148 = vmatprep.subr.mxu0 0.0
        %1149 = vmatpush2.xpose.msra.mxu0 0.0
        %1150 = vmatprep.subr.mxu0 0.0
        %1151 = vmatpush2.xpose.msra.mxu0 0.0
        %1152 = vmatprep.subr.mxu0 0.0
        %1153 = vmatpush2.xpose.msra.mxu0 0.0
        %1154 = vmatprep.subr.mxu0 0.0
        %1155 = vmatpush2.xpose.msra.mxu0 0.0
        %1156 = vmatprep.subr.mxu0 0.0
        %1157 = vmatpush2.xpose.msra.mxu0 0.0
        %1158 = vmatprep.subr.mxu0 0.0
        %1159 = vmatpush2.xpose.msra.mxu0 0.0
        %1160 = vmatprep.subr.mxu0 0.0
        %1161 = vmatpush2.xpose.msra.mxu0 0.0
        %1162 = vmatprep.subr.mxu0 0.0
        %1163 = vmatpush2.xpose.msra.mxu0 0.0
        %1164 = vmatprep.mubr.f32.mxu0 0.0
        %1165 = vmatmul.mubr.f32.gmra.mxu0 %v1093
        %v1166 = vpop.f32.mrf.mxu0
        %v1167 = vadd.f32 0.0, %v1166
        %v1168 = vpop.f32.mrf.mxu0
        %1169 = vmatprep.mubr.f32.mxu0 0.0
        %1170 = vmatmul.mubr.f32.gmra.mxu0 %v1095
        %v1171 = vpop.f32.mrf.mxu0
        %v1172 = vadd.f32 0.0, %v1171
        %v1173 = vpop.f32.mrf.mxu0
        %1174 = vdwg.mxu0
        %v1175 = vcombine.low %v866, %v857
        %v1176 = vsel %vm1092, %v1175, 0
        %v1178 = vsel %vm1092, %v867, 0
        %v1181 = vsel %vm1092, %v921, 0
        %1183 = vmatprep.subr.mxu0 0.0
        %1184 = vmatpush1.xpose.msra.mxu0 0.0
        %1185 = vmatprep.subr.mxu0 0.0
        %1186 = vmatpush1.xpose.msra.mxu0 0.0
        %1187 = vmatprep.subr.mxu0 0.0
        %1188 = vmatpush1.xpose.msra.mxu0 0.0
        %1189 = vmatprep.subr.mxu0 0.0
        %1190 = vmatpush1.xpose.msra.mxu0 0.0
        %1191 = vmatprep.subr.mxu0 0.0
        %1192 = vmatpush1.xpose.msra.mxu0 0.0
        %1193 = vmatprep.subr.mxu0 0.0
        %1194 = vmatpush1.xpose.msra.mxu0 0.0
        %1195 = vmatprep.subr.mxu0 0.0
        %1196 = vmatpush1.xpose.msra.mxu0 0.0
        %1197 = vmatprep.subr.mxu0 0.0
        %1198 = vmatpush1.xpose.msra.mxu0 0.0
        %1199 = vmatprep.subr.mxu0 0.0
        %1200 = vmatpush1.xpose.msra.mxu0 0.0
        %1201 = vmatprep.subr.mxu0 0.0
        %1202 = vmatpush1.xpose.msra.mxu0 0.0
        %1203 = vmatprep.subr.mxu0 0.0
        %1204 = vmatpush1.xpose.msra.mxu0 0.0
        %1205 = vmatprep.subr.mxu0 0.0
        %1206 = vmatpush1.xpose.msra.mxu0 0.0
        %1207 = vmatprep.subr.mxu0 0.0
        %1208 = vmatpush1.xpose.msra.mxu0 0.0
        %1209 = vmatprep.subr.mxu0 0.0
        %1210 = vmatpush1.xpose.msra.mxu0 0.0
        %1211 = vmatprep.subr.mxu0 0.0
        %1212 = vmatpush1.xpose.msra.mxu0 0.0
        %1213 = vmatprep.subr.mxu0 0.0
        %1214 = vmatpush1.xpose.msra.mxu0 %v1181
        %1215 = vmatprep.subr.mxu0 0.0
        %1216 = vmatpush2.xpose.msra.mxu0 0.0
        %1217 = vmatprep.subr.mxu0 0.0
        %1218 = vmatpush2.xpose.msra.mxu0 0.0
        %1219 = vmatprep.subr.mxu0 0.0
        %1220 = vmatpush2.xpose.msra.mxu0 0.0
        %1221 = vmatprep.subr.mxu0 0.0
        %1222 = vmatpush2.xpose.msra.mxu0 0.0
        %1223 = vmatprep.subr.mxu0 0.0
        %1224 = vmatpush2.xpose.msra.mxu0 0.0
        %1225 = vmatprep.subr.mxu0 0.0
        %1226 = vmatpush2.xpose.msra.mxu0 0.0
        %1227 = vmatprep.subr.mxu0 0.0
        %1228 = vmatpush2.xpose.msra.mxu0 0.0
        %1229 = vmatprep.subr.mxu0 0.0
        %1230 = vmatpush2.xpose.msra.mxu0 0.0
        %1231 = vmatprep.subr.mxu0 0.0
        %1232 = vmatpush2.xpose.msra.mxu0 0.0
        %1233 = vmatprep.subr.mxu0 0.0
        %1234 = vmatpush2.xpose.msra.mxu0 0.0
        %1235 = vmatprep.subr.mxu0 0.0
        %1236 = vmatpush2.xpose.msra.mxu0 0.0
        %1237 = vmatprep.subr.mxu0 0.0
        %1238 = vmatpush2.xpose.msra.mxu0 0.0
        %1239 = vmatprep.subr.mxu0 0.0
        %1240 = vmatpush2.xpose.msra.mxu0 0.0
        %1241 = vmatprep.subr.mxu0 0.0
        %1242 = vmatpush2.xpose.msra.mxu0 0.0
        %1243 = vmatprep.subr.mxu0 0.0
        %1244 = vmatpush2.xpose.msra.mxu0 0.0
        %1245 = vmatprep.subr.mxu0 0.0
        %1246 = vmatpush2.xpose.msra.mxu0 0.0
        %1247 = vmatprep.mubr.f32.mxu0 0.0
        %1248 = vmatmul.mubr.f32.gmra.mxu0 %v1176
        %v1249 = vpop.f32.mrf.mxu0
        %v1250 = vadd.f32 0.0, %v1249
        %v1251 = vpop.f32.mrf.mxu0
        %1252 = vmatprep.mubr.f32.mxu0 0.0
        %1253 = vmatmul.mubr.f32.gmra.mxu0 %v1178
        %v1254 = vpop.f32.mrf.mxu0
        %v1255 = vadd.f32 0.0, %v1254
        %v1256 = vpop.f32.mrf.mxu0
        %1257 = vdwg.mxu0
        %v1258 = vcombine.low %v1018, %v1034
        %v1259 = vsel %vm1092, %v1258, 0
        %v1261 = vsel %vm1092, %v1021, 0
        %1263 = vmatprep.subr.mxu0 0.0
        %1264 = vmatpush1.xpose.msra.mxu0 0.0
        %1265 = vmatprep.subr.mxu0 0.0
        %1266 = vmatpush1.xpose.msra.mxu0 0.0
        %1267 = vmatprep.subr.mxu0 0.0
        %1268 = vmatpush1.xpose.msra.mxu0 0.0
        %1269 = vmatprep.subr.mxu0 0.0
        %1270 = vmatpush1.xpose.msra.mxu0 0.0
        %1271 = vmatprep.subr.mxu0 0.0
        %1272 = vmatpush1.xpose.msra.mxu0 0.0
        %1273 = vmatprep.subr.mxu0 0.0
        %1274 = vmatpush1.xpose.msra.mxu0 0.0
        %1275 = vmatprep.subr.mxu0 0.0
        %1276 = vmatpush1.xpose.msra.mxu0 0.0
        %1277 = vmatprep.subr.mxu0 0.0
        %1278 = vmatpush1.xpose.msra.mxu0 0.0
        %1279 = vmatprep.subr.mxu0 0.0
        %1280 = vmatpush1.xpose.msra.mxu0 0.0
        %1281 = vmatprep.subr.mxu0 0.0
        %1282 = vmatpush1.xpose.msra.mxu0 0.0
        %1283 = vmatprep.subr.mxu0 0.0
        %1284 = vmatpush1.xpose.msra.mxu0 0.0
        %1285 = vmatprep.subr.mxu0 0.0
        %1286 = vmatpush1.xpose.msra.mxu0 0.0
        %1287 = vmatprep.subr.mxu0 0.0
        %1288 = vmatpush1.xpose.msra.mxu0 0.0
        %1289 = vmatprep.subr.mxu0 0.0
        %1290 = vmatpush1.xpose.msra.mxu0 0.0
        %1291 = vmatprep.subr.mxu0 0.0
        %1292 = vmatpush1.xpose.msra.mxu0 %v1261
        %1293 = vmatprep.subr.mxu0 0.0
        %1294 = vmatpush1.xpose.msra.mxu0 %v1259
        %1295 = vmatprep.subr.mxu0 0.0
        %1296 = vmatpush2.xpose.msra.mxu0 0.0
        %1297 = vmatprep.subr.mxu0 0.0
        %1298 = vmatpush2.xpose.msra.mxu0 0.0
        %1299 = vmatprep.subr.mxu0 0.0
        %1300 = vmatpush2.xpose.msra.mxu0 0.0
        %1301 = vmatprep.subr.mxu0 0.0
        %1302 = vmatpush2.xpose.msra.mxu0 0.0
        %1303 = vmatprep.subr.mxu0 0.0
        %1304 = vmatpush2.xpose.msra.mxu0 0.0
        %1305 = vmatprep.subr.mxu0 0.0
        %1306 = vmatpush2.xpose.msra.mxu0 0.0
        %1307 = vmatprep.subr.mxu0 0.0
        %1308 = vmatpush2.xpose.msra.mxu0 0.0
        %1309 = vmatprep.subr.mxu0 0.0
        %1310 = vmatpush2.xpose.msra.mxu0 0.0
        %1311 = vmatprep.subr.mxu0 0.0
        %1312 = vmatpush2.xpose.msra.mxu0 0.0
        %1313 = vmatprep.subr.mxu0 0.0
        %1314 = vmatpush2.xpose.msra.mxu0 0.0
        %1315 = vmatprep.subr.mxu0 0.0
        %1316 = vmatpush2.xpose.msra.mxu0 0.0
        %1317 = vmatprep.subr.mxu0 0.0
        %1318 = vmatpush2.xpose.msra.mxu0 0.0
        %1319 = vmatprep.subr.mxu0 0.0
        %1320 = vmatpush2.xpose.msra.mxu0 0.0
        %1321 = vmatprep.subr.mxu0 0.0
        %1322 = vmatpush2.xpose.msra.mxu0 0.0
        %1323 = vmatprep.subr.mxu0 0.0
        %1324 = vmatpush2.xpose.msra.mxu0 0.0
        %1325 = vmatprep.subr.mxu0 0.0
        %1326 = vmatpush2.xpose.msra.mxu0 0.0
        %1327 = vmatprep.mubr.f32.mxu0 0.0
        %1328 = vmatmul.mubr.f32.gmra.mxu0 %v1093
        %v1329 = vpop.f32.mrf.mxu0
        %v1330 = vadd.f32 0.0, %v1329
        %v1331 = vpop.f32.mrf.mxu0
        %1332 = vmatprep.mubr.f32.mxu0 0.0
        %1333 = vmatmul.mubr.f32.gmra.mxu0 %v1095
        %v1334 = vpop.f32.mrf.mxu0
        %v1335 = vadd.f32 0.0, %v1334
        %v1336 = vpop.f32.mrf.mxu0
        %1337 = vdwg.mxu0
        %v1338 = vcombine.low %v1035, %v1026
        %v1339 = vsel %vm1092, %v1338, 0
        %v1341 = vsel %vm1092, %v1036, 0
        %1343 = vmatprep.subr.mxu0 0.0
        %1344 = vmatpush1.xpose.msra.mxu0 0.0
        %1345 = vmatprep.subr.mxu0 0.0
        %1346 = vmatpush1.xpose.msra.mxu0 0.0
        %1347 = vmatprep.subr.mxu0 0.0
        %1348 = vmatpush1.xpose.msra.mxu0 0.0
        %1349 = vmatprep.subr.mxu0 0.0
        %1350 = vmatpush1.xpose.msra.mxu0 0.0
        %1351 = vmatprep.subr.mxu0 0.0
        %1352 = vmatpush1.xpose.msra.mxu0 0.0
        %1353 = vmatprep.subr.mxu0 0.0
        %1354 = vmatpush1.xpose.msra.mxu0 0.0
        %1355 = vmatprep.subr.mxu0 0.0
        %1356 = vmatpush1.xpose.msra.mxu0 0.0
        %1357 = vmatprep.subr.mxu0 0.0
        %1358 = vmatpush1.xpose.msra.mxu0 0.0
        %1359 = vmatprep.subr.mxu0 0.0
        %1360 = vmatpush1.xpose.msra.mxu0 0.0
        %1361 = vmatprep.subr.mxu0 0.0
        %1362 = vmatpush1.xpose.msra.mxu0 0.0
        %1363 = vmatprep.subr.mxu0 0.0
        %1364 = vmatpush1.xpose.msra.mxu0 0.0
        %1365 = vmatprep.subr.mxu0 0.0
        %1366 = vmatpush1.xpose.msra.mxu0 0.0
        %1367 = vmatprep.subr.mxu0 0.0
        %1368 = vmatpush1.xpose.msra.mxu0 0.0
        %1369 = vmatprep.subr.mxu0 0.0
        %1370 = vmatpush1.xpose.msra.mxu0 0.0
        %1371 = vmatprep.subr.mxu0 0.0
        %1372 = vmatpush1.xpose.msra.mxu0 %v1341
        %1373 = vmatprep.subr.mxu0 0.0
        %1374 = vmatpush1.xpose.msra.mxu0 %v1339
        %1375 = vmatprep.subr.mxu0 0.0
        %1376 = vmatpush2.xpose.msra.mxu0 0.0
        %1377 = vmatprep.subr.mxu0 0.0
        %1378 = vmatpush2.xpose.msra.mxu0 0.0
        %1379 = vmatprep.subr.mxu0 0.0
        %1380 = vmatpush2.xpose.msra.mxu0 0.0
        %1381 = vmatprep.subr.mxu0 0.0
        %1382 = vmatpush2.xpose.msra.mxu0 0.0
        %1383 = vmatprep.subr.mxu0 0.0
        %1384 = vmatpush2.xpose.msra.mxu0 0.0
        %1385 = vmatprep.subr.mxu0 0.0
        %1386 = vmatpush2.xpose.msra.mxu0 0.0
        %1387 = vmatprep.subr.mxu0 0.0
        %1388 = vmatpush2.xpose.msra.mxu0 0.0
        %1389 = vmatprep.subr.mxu0 0.0
        %1390 = vmatpush2.xpose.msra.mxu0 0.0
        %1391 = vmatprep.subr.mxu0 0.0
        %1392 = vmatpush2.xpose.msra.mxu0 0.0
        %1393 = vmatprep.subr.mxu0 0.0
        %1394 = vmatpush2.xpose.msra.mxu0 0.0
        %1395 = vmatprep.subr.mxu0 0.0
        %1396 = vmatpush2.xpose.msra.mxu0 0.0
        %1397 = vmatprep.subr.mxu0 0.0
        %1398 = vmatpush2.xpose.msra.mxu0 0.0
        %1399 = vmatprep.subr.mxu0 0.0
        %1400 = vmatpush2.xpose.msra.mxu0 0.0
        %1401 = vmatprep.subr.mxu0 0.0
        %1402 = vmatpush2.xpose.msra.mxu0 0.0
        %1403 = vmatprep.subr.mxu0 0.0
        %1404 = vmatpush2.xpose.msra.mxu0 0.0
        %1405 = vmatprep.subr.mxu0 0.0
        %1406 = vmatpush2.xpose.msra.mxu0 0.0
        %1407 = vmatprep.mubr.f32.mxu0 0.0
        %1408 = vmatmul.mubr.f32.gmra.mxu0 %v1176
        %v1409 = vpop.f32.mrf.mxu0
        %v1410 = vadd.f32 0.0, %v1409
        %v1411 = vpop.f32.mrf.mxu0
        %1412 = vmatprep.mubr.f32.mxu0 0.0
        %1413 = vmatmul.mubr.f32.gmra.mxu0 %v1178
        %v1414 = vpop.f32.mrf.mxu0
        %v1415 = vadd.f32 0.0, %v1414
        %v1416 = vpop.f32.mrf.mxu0
        %1417 = vdwg.mxu0
        %vm1418 = vcmask 64512
        %v1419 = vsel %vm1418, %v1167, -inf
        %1420 = vmax.xlane.f32.xlu0 %v1419
        %v1421 = vpop.xlane.xlu0 %1420
        %vm1422 = vcmask 60416
        %v1423 = vsel %vm1422, %v1172, -inf
        %1424 = vmax.xlane.f32.xlu0 %v1423
        %v1425 = vpop.xlane.xlu0 %1424
        %v1426 = vsel %vm1418, %v1250, -inf
        %1427 = vmax.xlane.f32.xlu0 %v1426
        %v1428 = vpop.xlane.xlu0 %1427
        %v1429 = vsel %vm1422, %v1255, -inf
        %1430 = vmax.xlane.f32.xlu0 %v1429
        %v1431 = vpop.xlane.xlu0 %1430
        %vm1432 = vcmask 97280
        %v1433 = vsel %vm1432, %v1330, -inf
        %1434 = vmax.xlane.f32.xlu0 %v1433
        %v1435 = vpop.xlane.xlu0 %1434
        %vm1436 = vcmask 93184
        %v1437 = vsel %vm1436, %v1335, -inf
        %1438 = vmax.xlane.f32.xlu0 %v1437
        %v1439 = vpop.xlane.xlu0 %1438
        %v1440 = vsel %vm1432, %v1410, -inf
        %1441 = vmax.xlane.f32.xlu0 %v1440
        %v1442 = vpop.xlane.xlu0 %1441
        %v1443 = vsel %vm1436, %v1415, -inf
        %1444 = vmax.xlane.f32.xlu0 %v1443
        %v1445 = vpop.xlane.xlu0 %1444
        %v1446 = vmax.f32 %v1421, %v1435
        %v1447 = vmax.f32 %v1425, %v1439
        %v1448 = vmax.f32 %v1428, %v1442
        %v1449 = vmax.f32 %v1431, %v1445
        %v1450 = vsub.f32 %v1167, %v1446
        %v1451 = vsub.f32 %v1172, %v1447
        %v1452 = vsub.f32 %v1250, %v1448
        %v1453 = vsub.f32 %v1255, %v1449
        %v1454 = vmul.f32 %v1450, 1.442695
        %v1455 = vpow.pop %v1454
        %v1456 = vmul.f32 %v1451, 1.442695
        %v1457 = vpow.pop %v1456
        %v1458 = vmul.f32 %v1452, 1.442695
        %v1459 = vpow.pop %v1458
        %v1460 = vmul.f32 %v1453, 1.442695
        %v1461 = vpow.pop %v1460
        %v1462 = vsub.f32 %v1330, %v1446
        %v1463 = vsub.f32 %v1335, %v1447
        %v1464 = vsub.f32 %v1410, %v1448
        %v1465 = vsub.f32 %v1415, %v1449
        %v1466 = vmul.f32 %v1462, 1.442695
        %v1467 = vpow.pop %v1466
        %v1468 = vmul.f32 %v1463, 1.442695
        %v1469 = vpow.pop %v1468
        %v1470 = vmul.f32 %v1464, 1.442695
        %v1471 = vpow.pop %v1470
        %v1472 = vmul.f32 %v1465, 1.442695
        %v1473 = vpow.pop %v1472
        %v1474 = vsel %vm1418, %v1455, 0.0
        %1475 = vadd.xlane.f32.xlu0 %v1474
        %v1476 = vpop.xlane.xlu0 %1475
        %v1477 = vsel %vm1422, %v1457, 0.0
        %1478 = vadd.xlane.f32.xlu0 %v1477
        %v1479 = vpop.xlane.xlu0 %1478
        %v1480 = vsel %vm1418, %v1459, 0.0
        %1481 = vadd.xlane.f32.xlu0 %v1480
        %v1482 = vpop.xlane.xlu0 %1481
        %v1483 = vsel %vm1422, %v1461, 0.0
        %1484 = vadd.xlane.f32.xlu0 %v1483
        %v1485 = vpop.xlane.xlu0 %1484
        %v1486 = vsel %vm1432, %v1467, 0.0
        %1487 = vadd.xlane.f32.xlu0 %v1486
        %v1488 = vpop.xlane.xlu0 %1487
        %v1489 = vsel %vm1436, %v1469, 0.0
        %1490 = vadd.xlane.f32.xlu0 %v1489
        %v1491 = vpop.xlane.xlu0 %1490
        %v1492 = vsel %vm1432, %v1471, 0.0
        %1493 = vadd.xlane.f32.xlu0 %v1492
        %v1494 = vpop.xlane.xlu0 %1493
        %v1495 = vsel %vm1436, %v1473, 0.0
        %1496 = vadd.xlane.f32.xlu0 %v1495
        %v1497 = vpop.xlane.xlu0 %1496
        %v1498 = vadd.f32 %v1476, %v1488
        %v1499 = vadd.f32 %v1479, %v1491
        %v1500 = vadd.f32 %v1482, %v1494
        %v1501 = vadd.f32 %v1485, %v1497
        %v1502 = vrcp.pop %v1498
        %v1503 = vrcp.pop %v1499
        %v1504 = vrcp.pop %v1500
        %v1505 = vrcp.pop %v1501
        %v1506 = vcombine.low %v1072, %v1088
        %v1509 = vsel %vm1432, %v1467, 0
        %v1512 = vsel %vm1432, %v1469, 0
        %vm1514 = vcmask 1043456
        %v1515 = vsel %vm1514, %v1075, 0
        %1517 = vmatprep.subr.mxu0 0.0
        %1518 = vmatpush1.msra.mxu0 0.0
        %1519 = vmatprep.subr.mxu0 0.0
        %1520 = vmatpush1.msra.mxu0 0.0
        %1521 = vmatprep.subr.mxu0 0.0
        %1522 = vmatpush1.msra.mxu0 0.0
        %1523 = vmatprep.subr.mxu0 0.0
        %1524 = vmatpush1.msra.mxu0 0.0
        %1525 = vmatprep.subr.mxu0 0.0
        %1526 = vmatpush1.msra.mxu0 0.0
        %1527 = vmatprep.subr.mxu0 0.0
        %1528 = vmatpush1.msra.mxu0 0.0
        %1529 = vmatprep.subr.mxu0 0.0
        %1530 = vmatpush1.msra.mxu0 0.0
        %1531 = vmatprep.subr.mxu0 0.0
        %1532 = vmatpush1.msra.mxu0 0.0
        %1533 = vmatprep.subr.mxu0 0.0
        %1534 = vmatpush1.msra.mxu0 0.0
        %1535 = vmatprep.subr.mxu0 0.0
        %1536 = vmatpush1.msra.mxu0 0.0
        %1537 = vmatprep.subr.mxu0 0.0
        %1538 = vmatpush1.msra.mxu0 0.0
        %1539 = vmatprep.subr.mxu0 0.0
        %1540 = vmatpush1.msra.mxu0 0.0
        %1541 = vmatprep.subr.mxu0 0.0
        %1542 = vmatpush1.msra.mxu0 0.0
        %1543 = vmatprep.subr.mxu0 0.0
        %1544 = vmatpush1.msra.mxu0 0.0
        %1545 = vmatprep.subr.mxu0 0.0
        %1546 = vmatpush1.msra.mxu0 %v1515
        %1547 = vmatprep.subr.mxu0 0.0
        %1548 = vmatpush1.msra.mxu0 %v1506
        %1549 = vmatprep.subr.mxu0 0.0
        %1550 = vmatpush2.msra.mxu0 0.0
        %1551 = vmatprep.subr.mxu0 0.0
        %1552 = vmatpush2.msra.mxu0 0.0
        %1553 = vmatprep.subr.mxu0 0.0
        %1554 = vmatpush2.msra.mxu0 0.0
        %1555 = vmatprep.subr.mxu0 0.0
        %1556 = vmatpush2.msra.mxu0 0.0
        %1557 = vmatprep.subr.mxu0 0.0
        %1558 = vmatpush2.msra.mxu0 0.0
        %1559 = vmatprep.subr.mxu0 0.0
        %1560 = vmatpush2.msra.mxu0 0.0
        %1561 = vmatprep.subr.mxu0 0.0
        %1562 = vmatpush2.msra.mxu0 0.0
        %1563 = vmatprep.subr.mxu0 0.0
        %1564 = vmatpush2.msra.mxu0 0.0
        %1565 = vmatprep.subr.mxu0 0.0
        %1566 = vmatpush2.msra.mxu0 0.0
        %1567 = vmatprep.subr.mxu0 0.0
        %1568 = vmatpush2.msra.mxu0 0.0
        %1569 = vmatprep.subr.mxu0 0.0
        %1570 = vmatpush2.msra.mxu0 0.0
        %1571 = vmatprep.subr.mxu0 0.0
        %1572 = vmatpush2.msra.mxu0 0.0
        %1573 = vmatprep.subr.mxu0 0.0
        %1574 = vmatpush2.msra.mxu0 0.0
        %1575 = vmatprep.subr.mxu0 0.0
        %1576 = vmatpush2.msra.mxu0 0.0
        %1577 = vmatprep.subr.mxu0 0.0
        %1578 = vmatpush2.msra.mxu0 0.0
        %1579 = vmatprep.subr.mxu0 0.0
        %1580 = vmatpush2.msra.mxu0 0.0
        %1581 = vmatprep.mubr.f32.mxu0 0.0
        %1582 = vmatmul.mubr.f32.gmra.mxu0 %v1509
        %v1583 = vpop.f32.mrf.mxu0
        %v1584 = vadd.f32 0.0, %v1583
        %v1585 = vpop.f32.mrf.mxu0
        %1586 = vmatprep.mubr.f32.mxu0 0.0
        %1587 = vmatmul.mubr.f32.gmra.mxu0 %v1512
        %v1588 = vpop.f32.mrf.mxu0
        %v1589 = vadd.f32 0.0, %v1588
        %v1590 = vpop.f32.mrf.mxu0
        %1591 = vdwg.mxu0
        %v1592 = vcombine.low %v1089, %v1080
        %v1595 = vsel %vm1432, %v1471, 0
        %v1598 = vsel %vm1432, %v1473, 0
        %v1600 = vsel %vm1514, %v1090, 0
        %1602 = vmatprep.subr.mxu0 0.0
        %1603 = vmatpush1.msra.mxu0 0.0
        %1604 = vmatprep.subr.mxu0 0.0
        %1605 = vmatpush1.msra.mxu0 0.0
        %1606 = vmatprep.subr.mxu0 0.0
        %1607 = vmatpush1.msra.mxu0 0.0
        %1608 = vmatprep.subr.mxu0 0.0
        %1609 = vmatpush1.msra.mxu0 0.0
        %1610 = vmatprep.subr.mxu0 0.0
        %1611 = vmatpush1.msra.mxu0 0.0
        %1612 = vmatprep.subr.mxu0 0.0
        %1613 = vmatpush1.msra.mxu0 0.0
        %1614 = vmatprep.subr.mxu0 0.0
        %1615 = vmatpush1.msra.mxu0 0.0
        %1616 = vmatprep.subr.mxu0 0.0
        %1617 = vmatpush1.msra.mxu0 0.0
        %1618 = vmatprep.subr.mxu0 0.0
        %1619 = vmatpush1.msra.mxu0 0.0
        %1620 = vmatprep.subr.mxu0 0.0
        %1621 = vmatpush1.msra.mxu0 0.0
        %1622 = vmatprep.subr.mxu0 0.0
        %1623 = vmatpush1.msra.mxu0 0.0
        %1624 = vmatprep.subr.mxu0 0.0
        %1625 = vmatpush1.msra.mxu0 0.0
        %1626 = vmatprep.subr.mxu0 0.0
        %1627 = vmatpush1.msra.mxu0 0.0
        %1628 = vmatprep.subr.mxu0 0.0
        %1629 = vmatpush1.msra.mxu0 0.0
        %1630 = vmatprep.subr.mxu0 0.0
        %1631 = vmatpush1.msra.mxu0 %v1600
        %1632 = vmatprep.subr.mxu0 0.0
        %1633 = vmatpush1.msra.mxu0 %v1592
        %1634 = vmatprep.subr.mxu0 0.0
        %1635 = vmatpush2.msra.mxu0 0.0
        %1636 = vmatprep.subr.mxu0 0.0
        %1637 = vmatpush2.msra.mxu0 0.0
        %1638 = vmatprep.subr.mxu0 0.0
        %1639 = vmatpush2.msra.mxu0 0.0
        %1640 = vmatprep.subr.mxu0 0.0
        %1641 = vmatpush2.msra.mxu0 0.0
        %1642 = vmatprep.subr.mxu0 0.0
        %1643 = vmatpush2.msra.mxu0 0.0
        %1644 = vmatprep.subr.mxu0 0.0
        %1645 = vmatpush2.msra.mxu0 0.0
        %1646 = vmatprep.subr.mxu0 0.0
        %1647 = vmatpush2.msra.mxu0 0.0
        %1648 = vmatprep.subr.mxu0 0.0
        %1649 = vmatpush2.msra.mxu0 0.0
        %1650 = vmatprep.subr.mxu0 0.0
        %1651 = vmatpush2.msra.mxu0 0.0
        %1652 = vmatprep.subr.mxu0 0.0
        %1653 = vmatpush2.msra.mxu0 0.0
        %1654 = vmatprep.subr.mxu0 0.0
        %1655 = vmatpush2.msra.mxu0 0.0
        %1656 = vmatprep.subr.mxu0 0.0
        %1657 = vmatpush2.msra.mxu0 0.0
        %1658 = vmatprep.subr.mxu0 0.0
        %1659 = vmatpush2.msra.mxu0 0.0
        %1660 = vmatprep.subr.mxu0 0.0
        %1661 = vmatpush2.msra.mxu0 0.0
        %1662 = vmatprep.subr.mxu0 0.0
        %1663 = vmatpush2.msra.mxu0 0.0
        %1664 = vmatprep.subr.mxu0 0.0
        %1665 = vmatpush2.msra.mxu0 0.0
        %1666 = vmatprep.mubr.f32.mxu0 0.0
        %1667 = vmatmul.mubr.f32.gmra.mxu0 %v1595
        %v1668 = vpop.f32.mrf.mxu0
        %v1669 = vadd.f32 0.0, %v1668
        %v1670 = vpop.f32.mrf.mxu0
        %1671 = vmatprep.mubr.f32.mxu0 0.0
        %1672 = vmatmul.mubr.f32.gmra.mxu0 %v1598
        %v1673 = vpop.f32.mrf.mxu0
        %v1674 = vadd.f32 0.0, %v1673
        %v1675 = vpop.f32.mrf.mxu0
        %1676 = vdwg.mxu0
        %v1678 = vsel %vm1418, %v1455, 0
        %v1681 = vsel %vm1418, %v1457, 0
        %1683 = vmatprep.subr.mxu0 0.0
        %1684 = vmatpush1.msra.mxu0 0.0
        %1685 = vmatprep.subr.mxu0 0.0
        %1686 = vmatpush1.msra.mxu0 0.0
        %1687 = vmatprep.subr.mxu0 0.0
        %1688 = vmatpush1.msra.mxu0 0.0
        %1689 = vmatprep.subr.mxu0 0.0
        %1690 = vmatpush1.msra.mxu0 0.0
        %1691 = vmatprep.subr.mxu0 0.0
        %1692 = vmatpush1.msra.mxu0 0.0
        %1693 = vmatprep.subr.mxu0 0.0
        %1694 = vmatpush1.msra.mxu0 0.0
        %1695 = vmatprep.subr.mxu0 0.0
        %1696 = vmatpush1.msra.mxu0 0.0
        %1697 = vmatprep.subr.mxu0 0.0
        %1698 = vmatpush1.msra.mxu0 0.0
        %1699 = vmatprep.subr.mxu0 0.0
        %1700 = vmatpush1.msra.mxu0 0.0
        %1701 = vmatprep.subr.mxu0 0.0
        %1702 = vmatpush1.msra.mxu0 0.0
        %1703 = vmatprep.subr.mxu0 0.0
        %1704 = vmatpush1.msra.mxu0 0.0
        %1705 = vmatprep.subr.mxu0 0.0
        %1706 = vmatpush1.msra.mxu0 0.0
        %1707 = vmatprep.subr.mxu0 0.0
        %1708 = vmatpush1.msra.mxu0 0.0
        %1709 = vmatprep.subr.mxu0 0.0
        %1710 = vmatpush1.msra.mxu0 0.0
        %1711 = vmatprep.subr.mxu0 0.0
        %1712 = vmatpush1.msra.mxu0 0.0
        %1713 = vmatprep.subr.mxu0 0.0
        %1714 = vmatpush1.msra.mxu0 %v971
        %1715 = vmatprep.subr.mxu0 0.0
        %1716 = vmatpush2.msra.mxu0 0.0
        %1717 = vmatprep.subr.mxu0 0.0
        %1718 = vmatpush2.msra.mxu0 0.0
        %1719 = vmatprep.subr.mxu0 0.0
        %1720 = vmatpush2.msra.mxu0 0.0
        %1721 = vmatprep.subr.mxu0 0.0
        %1722 = vmatpush2.msra.mxu0 0.0
        %1723 = vmatprep.subr.mxu0 0.0
        %1724 = vmatpush2.msra.mxu0 0.0
        %1725 = vmatprep.subr.mxu0 0.0
        %1726 = vmatpush2.msra.mxu0 0.0
        %1727 = vmatprep.subr.mxu0 0.0
        %1728 = vmatpush2.msra.mxu0 0.0
        %1729 = vmatprep.subr.mxu0 0.0
        %1730 = vmatpush2.msra.mxu0 0.0
        %1731 = vmatprep.subr.mxu0 0.0
        %1732 = vmatpush2.msra.mxu0 0.0
        %1733 = vmatprep.subr.mxu0 0.0
        %1734 = vmatpush2.msra.mxu0 0.0
        %1735 = vmatprep.subr.mxu0 0.0
        %1736 = vmatpush2.msra.mxu0 0.0
        %1737 = vmatprep.subr.mxu0 0.0
        %1738 = vmatpush2.msra.mxu0 0.0
        %1739 = vmatprep.subr.mxu0 0.0
        %1740 = vmatpush2.msra.mxu0 0.0
        %1741 = vmatprep.subr.mxu0 0.0
        %1742 = vmatpush2.msra.mxu0 0.0
        %1743 = vmatprep.subr.mxu0 0.0
        %1744 = vmatpush2.msra.mxu0 0.0
        %1745 = vmatprep.subr.mxu0 0.0
        %1746 = vmatpush2.msra.mxu0 0.0
        %1747 = vmatprep.mubr.f32.mxu0 0.0
        %1748 = vmatmul.mubr.f32.gmra.mxu0 %v1678
        %v1749 = vpop.f32.mrf.mxu0
        %v1750 = vadd.f32 %v1584, %v1749
        %v1751 = vpop.f32.mrf.mxu0
        %1752 = vmatprep.mubr.f32.mxu0 0.0
        %1753 = vmatmul.mubr.f32.gmra.mxu0 %v1681
        %v1754 = vpop.f32.mrf.mxu0
        %v1755 = vadd.f32 %v1589, %v1754
        %v1756 = vpop.f32.mrf.mxu0
        %1757 = vdwg.mxu0
        %v1759 = vsel %vm1418, %v1459, 0
        %v1762 = vsel %vm1418, %v1461, 0
        %1764 = vmatprep.subr.mxu0 0.0
        %1765 = vmatpush1.msra.mxu0 0.0
        %1766 = vmatprep.subr.mxu0 0.0
        %1767 = vmatpush1.msra.mxu0 0.0
        %1768 = vmatprep.subr.mxu0 0.0
        %1769 = vmatpush1.msra.mxu0 0.0
        %1770 = vmatprep.subr.mxu0 0.0
        %1771 = vmatpush1.msra.mxu0 0.0
        %1772 = vmatprep.subr.mxu0 0.0
        %1773 = vmatpush1.msra.mxu0 0.0
        %1774 = vmatprep.subr.mxu0 0.0
        %1775 = vmatpush1.msra.mxu0 0.0
        %1776 = vmatprep.subr.mxu0 0.0
        %1777 = vmatpush1.msra.mxu0 0.0
        %1778 = vmatprep.subr.mxu0 0.0
        %1779 = vmatpush1.msra.mxu0 0.0
        %1780 = vmatprep.subr.mxu0 0.0
        %1781 = vmatpush1.msra.mxu0 0.0
        %1782 = vmatprep.subr.mxu0 0.0
        %1783 = vmatpush1.msra.mxu0 0.0
        %1784 = vmatprep.subr.mxu0 0.0
        %1785 = vmatpush1.msra.mxu0 0.0
        %1786 = vmatprep.subr.mxu0 0.0
        %1787 = vmatpush1.msra.mxu0 0.0
        %1788 = vmatprep.subr.mxu0 0.0
        %1789 = vmatpush1.msra.mxu0 0.0
        %1790 = vmatprep.subr.mxu0 0.0
        %1791 = vmatpush1.msra.mxu0 0.0
        %1792 = vmatprep.subr.mxu0 0.0
        %1793 = vmatpush1.msra.mxu0 0.0
        %1794 = vmatprep.subr.mxu0 0.0
        %1795 = vmatpush1.msra.mxu0 %v974
        %1796 = vmatprep.subr.mxu0 0.0
        %1797 = vmatpush2.msra.mxu0 0.0
        %1798 = vmatprep.subr.mxu0 0.0
        %1799 = vmatpush2.msra.mxu0 0.0
        %1800 = vmatprep.subr.mxu0 0.0
        %1801 = vmatpush2.msra.mxu0 0.0
        %1802 = vmatprep.subr.mxu0 0.0
        %1803 = vmatpush2.msra.mxu0 0.0
        %1804 = vmatprep.subr.mxu0 0.0
        %1805 = vmatpush2.msra.mxu0 0.0
        %1806 = vmatprep.subr.mxu0 0.0
        %1807 = vmatpush2.msra.mxu0 0.0
        %1808 = vmatprep.subr.mxu0 0.0
        %1809 = vmatpush2.msra.mxu0 0.0
        %1810 = vmatprep.subr.mxu0 0.0
        %1811 = vmatpush2.msra.mxu0 0.0
        %1812 = vmatprep.subr.mxu0 0.0
        %1813 = vmatpush2.msra.mxu0 0.0
        %1814 = vmatprep.subr.mxu0 0.0
        %1815 = vmatpush2.msra.mxu0 0.0
        %1816 = vmatprep.subr.mxu0 0.0
        %1817 = vmatpush2.msra.mxu0 0.0
        %1818 = vmatprep.subr.mxu0 0.0
        %1819 = vmatpush2.msra.mxu0 0.0
        %1820 = vmatprep.subr.mxu0 0.0
        %1821 = vmatpush2.msra.mxu0 0.0
        %1822 = vmatprep.subr.mxu0 0.0
        %1823 = vmatpush2.msra.mxu0 0.0
        %1824 = vmatprep.subr.mxu0 0.0
        %1825 = vmatpush2.msra.mxu0 0.0
        %1826 = vmatprep.subr.mxu0 0.0
        %1827 = vmatpush2.msra.mxu0 0.0
        %1828 = vmatprep.mubr.f32.mxu0 0.0
        %1829 = vmatmul.mubr.f32.gmra.mxu0 %v1759
        %v1830 = vpop.f32.mrf.mxu0
        %v1831 = vadd.f32 %v1669, %v1830
        %v1832 = vpop.f32.mrf.mxu0
        %1833 = vmatprep.mubr.f32.mxu0 0.0
        %1834 = vmatmul.mubr.f32.gmra.mxu0 %v1762
        %v1835 = vpop.f32.mrf.mxu0
        %v1836 = vadd.f32 %v1674, %v1835
        %v1837 = vpop.f32.mrf.mxu0
        %1838 = vdwg.mxu0
        %v1839 = vmul.f32 %v1750, %v1502
        %v1840 = vmul.f32 %v1755, %v1503
        %v1841 = vmul.f32 %v1831, %v1504
        %v1842 = vmul.f32 %v1836, %v1505
        %v1847 = vcombine.high %v1839, %v1839
        %v1848 = vcombine.high %v1841, %v1841
        %v1849 = vcombine.low %v1839, %v1847
        %v1850 = vcombine.low %v1840, %v1841
        %v1851 = vcombine.low %v1848, %v1842
        %v1855 = vpack.c.bf16 %v1850, %v1849
        %v1856 = vpack.c.bf16 %v1851, %v1851
        %v1859 = vunpack.c.l.b16 %v794
        %v1860 = vunpack.c.l.b16 %v795
        %v1861 = vpack.c.b16 %v1860, %v1859
        %v1864 = vsel %vm1092, %v1855, 0
        %v1867 = vsel %vm1092, %v1856, 0
        %1869 = vmatprep.subr.bf16.mxu0 0
        %1870 = vmatpush1.bf16.msra.mxu0 0
        %1871 = vmatprep.subr.bf16.mxu0 0
        %1872 = vmatpush1.bf16.msra.mxu0 0
        %1873 = vmatprep.subr.bf16.mxu0 0
        %1874 = vmatpush1.bf16.msra.mxu0 0
        %1875 = vmatprep.subr.bf16.mxu0 0
        %1876 = vmatpush1.bf16.msra.mxu0 0
        %1877 = vmatprep.subr.bf16.mxu0 0
        %1878 = vmatpush1.bf16.msra.mxu0 0
        %1879 = vmatprep.subr.bf16.mxu0 0
        %1880 = vmatpush1.bf16.msra.mxu0 0
        %1881 = vmatprep.subr.bf16.mxu0 0
        %1882 = vmatpush1.bf16.msra.mxu0 0
        %1883 = vmatprep.subr.bf16.mxu0 0
        %1884 = vmatpush1.bf16.msra.mxu0 %v1861
        %1885 = vmatprep.subr.bf16.mxu0 0
        %1886 = vmatpush2.bf16.msra.mxu0 0
        %1887 = vmatprep.subr.bf16.mxu0 0
        %1888 = vmatpush2.bf16.msra.mxu0 0
        %1889 = vmatprep.subr.bf16.mxu0 0
        %1890 = vmatpush2.bf16.msra.mxu0 0
        %1891 = vmatprep.subr.bf16.mxu0 0
        %1892 = vmatpush2.bf16.msra.mxu0 0
        %1893 = vmatprep.subr.bf16.mxu0 0
        %1894 = vmatpush2.bf16.msra.mxu0 0
        %1895 = vmatprep.subr.bf16.mxu0 0
        %1896 = vmatpush2.bf16.msra.mxu0 0
        %1897 = vmatprep.subr.bf16.mxu0 0
        %1898 = vmatpush2.bf16.msra.mxu0 0
        %1899 = vmatprep.subr.bf16.mxu0 0
        %1900 = vmatpush2.bf16.msra.mxu0 0
        %1901 = vmatprep.mubr.bf16.mxu0 0
        %1902 = vmatmul.mubr.bf16.gmra.mxu0 %v1864
        %v1903 = vpop.f32.mrf.mxu0
        %v1904 = vadd.f32 0.0, %v1903
        %v1905 = vpop.f32.mrf.mxu0
        %v1906 = vpop.f32.mrf.mxu0
        %v1907 = vadd.f32 0.0, %v1906
        %v1908 = vpop.f32.mrf.mxu0
        %1909 = vmatprep.mubr.bf16.mxu0 0
        %1910 = vmatmul.mubr.bf16.gmra.mxu0 %v1867
        %v1911 = vpop.f32.mrf.mxu0
        %v1912 = vadd.f32 0.0, %v1911
        %v1913 = vpop.f32.mrf.mxu0
        %v1914 = vpop.f32.mrf.mxu0
        %v1915 = vpop.f32.mrf.mxu0
        %1916 = vdwg.mxu0
        %v1917 = vadd.f32 %v769, %v1904
        %v1918 = vadd.f32 %v770, %v1907
        %v1919 = vadd.f32 %v771, %v1912
      $region77: #{perceiver_resampler.1} parent=67 // loop_footer
        %s768 = sadd.s32 1, %s764
      $region78: #{perceiver_resampler.1} parent=67 // loop_footer_branch
        %763 = sbr.rel target = $region74
      $region79: #{perceiver_resampler.1} parent=67 // loop_exit
        _
      %v1920 = vsel %vm700, %v769, 0.0
      %1921 = vadd.xlane.f32.xlu0 %v1920
      %v1922 = vpop.xlane.xlu0 %1921
      %v1923 = vsel %vm700, %v770, 0.0
      %1924 = vadd.xlane.f32.xlu0 %v1923
      %v1925 = vpop.xlane.xlu0 %1924
      %v1926 = vsel %vm700, %v771, 0.0
      %1927 = vadd.xlane.f32.xlu0 %v1926
      %v1928 = vpop.xlane.xlu0 %1927
      %v1929 = vmul.f32 %v1922, %v710
      %v1930 = vmul.f32 %v1925, %v710
      %v1931 = vmul.f32 %v1928, %v710
      %v1932 = vsub.f32 %v769, %v1929
      %v1933 = vsub.f32 %v770, %v1930
      %v1934 = vsub.f32 %v771, %v1931
      %v1935 = vmul.f32 %v1932, %v1932
      %v1936 = vmul.f32 %v1933, %v1933
      %v1937 = vmul.f32 %v1934, %v1934
      %v1938 = vsel %vm700, %v1935, 0.0
      %1939 = vadd.xlane.f32.xlu0 %v1938
      %v1940 = vpop.xlane.xlu0 %1939
      %v1941 = vsel %vm700, %v1936, 0.0
      %1942 = vadd.xlane.f32.xlu0 %v1941
      %v1943 = vpop.xlane.xlu0 %1942
      %v1944 = vsel %vm700, %v1937, 0.0
      %1945 = vadd.xlane.f32.xlu0 %v1944
      %v1946 = vpop.xlane.xlu0 %1945
      %v1947 = vmul.f32 %v1940, %v710
      %v1948 = vmul.f32 %v1943, %v710
      %v1949 = vmul.f32 %v1946, %v710
      %v1950 = vadd.f32 %v1947, 1e-05
      %v1951 = vadd.f32 %v1948, 1e-05
      %v1952 = vadd.f32 %v1949, 1e-05
      %v1953 = vrsqrt.pop %v1950
      %v1954 = vrsqrt.pop %v1951
      %v1955 = vrsqrt.pop %v1952
      %v1956 = vmul.f32 %v1932, %v1953
      %v1957 = vmul.f32 %v1933, %v1954
      %v1958 = vmul.f32 %v1934, %v1955
      %v1959 = vlaneseq
      %v1960 = vshrl.u32 %v1959, 7
      %v1961 = vsub.s32 4, %v1960
      %v1962 = vrot.slane %v682, %v1961
      %v1963 = vmul.f32 %v1956, %v1962
      %v1964 = vmul.f32 %v1957, %v1962
      %v1965 = vmul.f32 %v1958, %v1962
      %v1966 = vlaneseq
      %v1967 = vshrl.u32 %v1966, 7
      %v1968 = vsub.s32 5, %v1967
      %v1969 = vrot.slane %v682, %v1968
      %v1970 = vadd.f32 %v1963, %v1969
      %v1971 = vadd.f32 %v1964, %v1969
      %v1972 = vadd.f32 %v1965, %v1969
      %v1973 = vadd.f32 %v683, %v1970
      %v1974 = vadd.f32 %v684, %v1971
      %v1975 = vadd.f32 %v685, %v1972
      %v1976 = vld [vmem:[%s600] sm:$0x1]
      %v1977 = vsel %vm700, %v1973, 0.0
      %1978 = vadd.xlane.f32.xlu0 %v1977
      %v1979 = vpop.xlane.xlu0 %1978
      %v1980 = vsel %vm700, %v1974, 0.0
      %1981 = vadd.xlane.f32.xlu0 %v1980
      %v1982 = vpop.xlane.xlu0 %1981
      %v1983 = vsel %vm700, %v1975, 0.0
      %1984 = vadd.xlane.f32.xlu0 %v1983
      %v1985 = vpop.xlane.xlu0 %1984
      %v1986 = vmul.f32 %v1979, %v710
      %v1987 = vmul.f32 %v1982, %v710
      %v1988 = vmul.f32 %v1985, %v710
      %v1989 = vsub.f32 %v1973, %v1986
      %v1990 = vsub.f32 %v1974, %v1987
      %v1991 = vsub.f32 %v1975, %v1988
      %v1992 = vmul.f32 %v1989, %v1989
      %v1993 = vmul.f32 %v1990, %v1990
      %v1994 = vmul.f32 %v1991, %v1991
      %v1995 = vsel %vm700, %v1992, 0.0
      %1996 = vadd.xlane.f32.xlu0 %v1995
      %v1997 = vpop.xlane.xlu0 %1996
      %v1998 = vsel %vm700, %v1993, 0.0
      %1999 = vadd.xlane.f32.xlu0 %v1998
      %v2000 = vpop.xlane.xlu0 %1999
      %v2001 = vsel %vm700, %v1994, 0.0
      %2002 = vadd.xlane.f32.xlu0 %v2001
      %v2003 = vpop.xlane.xlu0 %2002
      %v2004 = vmul.f32 %v1997, %v710
      %v2005 = vmul.f32 %v2000, %v710
      %v2006 = vmul.f32 %v2003, %v710
      %v2007 = vadd.f32 %v2004, 1e-05
      %v2008 = vadd.f32 %v2005, 1e-05
      %v2009 = vadd.f32 %v2006, 1e-05
      %v2010 = vrsqrt.pop %v2007
      %v2011 = vrsqrt.pop %v2008
      %v2012 = vrsqrt.pop %v2009
      %v2013 = vmul.f32 %v1989, %v2010
      %v2014 = vmul.f32 %v1990, %v2011
      %v2015 = vmul.f32 %v1991, %v2012
      %v2017 = vlaneseq
      %v2018 = vshrl.u32 %v2017, 7
      %v2019 = vsub.s32 0, %v2018
      %v2020 = vrot.slane %v1976, %v2019
      %v2022 = vmul.f32 %v2013, %v2020
      %v2023 = vmul.f32 %v2014, %v2020
      %v2024 = vmul.f32 %v2015, %v2020
      %v2025 = vadd.f32 %v2022, 0.0
      %v2026 = vadd.f32 %v2023, 0.0
      %v2027 = vadd.f32 %v2024, 0.0
      %v2028 = vpack.c.bf16 %v2026, %v2025
      %v2029 = vpack.c.bf16 %v2027, %v2027
      %v2030 = vld [vmem:[%s605] sm:$0xf]
      %v2031 = vld [vmem:[%s605 + $0x4] sm:$0xf]
      %v2032 = vld [vmem:[%s605 + $0x8] sm:$0xf]
      %v2033 = vld [vmem:[%s605 + $0xc] sm:$0xf]
      %v2038 = vunpack.c.l.b16 %v2030
      %v2039 = vunpack.c.l.b16 %v2031
      %v2040 = vunpack.c.l.b16 %v2032
      %v2041 = vunpack.c.l.b16 %v2033
      %v2042 = vpack.c.b16 %v2039, %v2038
      %v2043 = vpack.c.b16 %v2041, %v2040
      %v2047 = vsel %vm700, %v2028, 0
      %v2050 = vsel %vm700, %v2029, 0
      %2052 = vmatprep.subr.bf16.mxu0 0
      %2053 = vmatpush1.bf16.msra.mxu0 0
      %2054 = vmatprep.subr.bf16.mxu0 0
      %2055 = vmatpush1.bf16.msra.mxu0 0
      %2056 = vmatprep.subr.bf16.mxu0 0
      %2057 = vmatpush1.bf16.msra.mxu0 0
      %2058 = vmatprep.subr.bf16.mxu0 0
      %2059 = vmatpush1.bf16.msra.mxu0 0
      %2060 = vmatprep.subr.bf16.mxu0 0
      %2061 = vmatpush1.bf16.msra.mxu0 0
      %2062 = vmatprep.subr.bf16.mxu0 0
      %2063 = vmatpush1.bf16.msra.mxu0 0
      %2064 = vmatprep.subr.bf16.mxu0 0
      %2065 = vmatpush1.bf16.msra.mxu0 %v2043
      %2066 = vmatprep.subr.bf16.mxu0 0
      %2067 = vmatpush1.bf16.msra.mxu0 %v2042
      %2068 = vmatprep.subr.bf16.mxu0 0
      %2069 = vmatpush2.bf16.msra.mxu0 0
      %2070 = vmatprep.subr.bf16.mxu0 0
      %2071 = vmatpush2.bf16.msra.mxu0 0
      %2072 = vmatprep.subr.bf16.mxu0 0
      %2073 = vmatpush2.bf16.msra.mxu0 0
      %2074 = vmatprep.subr.bf16.mxu0 0
      %2075 = vmatpush2.bf16.msra.mxu0 0
      %2076 = vmatprep.subr.bf16.mxu0 0
      %2077 = vmatpush2.bf16.msra.mxu0 0
      %2078 = vmatprep.subr.bf16.mxu0 0
      %2079 = vmatpush2.bf16.msra.mxu0 0
      %2080 = vmatprep.subr.bf16.mxu0 0
      %2081 = vmatpush2.bf16.msra.mxu0 0
      %2082 = vmatprep.subr.bf16.mxu0 0
      %2083 = vmatpush2.bf16.msra.mxu0 0
      %2084 = vmatprep.mubr.bf16.mxu0 0
      %2085 = vmatmul.mubr.bf16.gmra.mxu0 %v2047
      %v2086 = vpop.f32.mrf.mxu0
      %v2087 = vadd.f32 0.0, %v2086
      %v2088 = vpop.f32.mrf.mxu0
      %v2089 = vpop.f32.mrf.mxu0
      %v2090 = vadd.f32 0.0, %v2089
      %v2091 = vpop.f32.mrf.mxu0
      %2092 = vmatprep.mubr.bf16.mxu0 0
      %2093 = vmatmul.mubr.bf16.gmra.mxu0 %v2050
      %v2094 = vpop.f32.mrf.mxu0
      %v2095 = vadd.f32 0.0, %v2094
      %v2096 = vpop.f32.mrf.mxu0
      %v2097 = vpop.f32.mrf.mxu0
      %v2098 = vpop.f32.mrf.mxu0
      %2099 = vdwg.mxu0
      %v2100 = vmul.f32 %v2087, 0.5
      %v2101 = vmul.f32 %v2090, 0.5
      %v2102 = vmul.f32 %v2095, 0.5
      %v2103 = vmul.f32 %v2087, 0.044715
      %v2104 = vmul.f32 %v2090, 0.044715
      %v2105 = vmul.f32 %v2095, 0.044715
      %v2106 = vmul.f32 %v2103, %v2087
      %v2107 = vmul.f32 %v2104, %v2090
      %v2108 = vmul.f32 %v2105, %v2095
      %v2109 = vmul.f32 %v2106, %v2087
      %v2110 = vmul.f32 %v2107, %v2090
      %v2111 = vmul.f32 %v2108, %v2095
      %v2112 = vadd.f32 %v2087, %v2109
      %v2113 = vadd.f32 %v2090, %v2110
      %v2114 = vadd.f32 %v2095, %v2111
      %v2115 = vmul.f32 %v2112, 0.7978846
      %v2116 = vmul.f32 %v2113, 0.7978846
      %v2117 = vmul.f32 %v2114, 0.7978846
      %v2118 = vtanh.pop %v2115
      %v2119 = vtanh.pop %v2116
      %v2120 = vtanh.pop %v2117
      %v2121 = vadd.f32 %v2118, 1.0
      %v2122 = vadd.f32 %v2119, 1.0
      %v2123 = vadd.f32 %v2120, 1.0
      %v2124 = vmul.f32 %v2100, %v2121
      %v2125 = vmul.f32 %v2101, %v2122
      %v2126 = vmul.f32 %v2102, %v2123
      %v2127 = vld [vmem:[%s608] sm:$0x1]
      %2128 = vadd.xlane.f32.xlu0 %v2124
      %v2129 = vpop.xlane.xlu0 %2128
      %2130 = vadd.xlane.f32.xlu0 %v2125
      %v2131 = vpop.xlane.xlu0 %2130
      %2132 = vadd.xlane.f32.xlu0 %v2126
      %v2133 = vpop.xlane.xlu0 %2132
      %v2134 = vrcp.pop 128.0
      %v2135 = vmul.f32 %v2129, %v2134
      %v2136 = vmul.f32 %v2131, %v2134
      %v2137 = vmul.f32 %v2133, %v2134
      %v2138 = vsub.f32 %v2124, %v2135
      %v2139 = vsub.f32 %v2125, %v2136
      %v2140 = vsub.f32 %v2126, %v2137
      %v2141 = vmul.f32 %v2138, %v2138
      %v2142 = vmul.f32 %v2139, %v2139
      %v2143 = vmul.f32 %v2140, %v2140
      %2144 = vadd.xlane.f32.xlu0 %v2141
      %v2145 = vpop.xlane.xlu0 %2144
      %2146 = vadd.xlane.f32.xlu0 %v2142
      %v2147 = vpop.xlane.xlu0 %2146
      %2148 = vadd.xlane.f32.xlu0 %v2143
      %v2149 = vpop.xlane.xlu0 %2148
      %v2150 = vmul.f32 %v2145, %v2134
      %v2151 = vmul.f32 %v2147, %v2134
      %v2152 = vmul.f32 %v2149, %v2134
      %v2153 = vadd.f32 %v2150, 1e-05
      %v2154 = vadd.f32 %v2151, 1e-05
      %v2155 = vadd.f32 %v2152, 1e-05
      %v2156 = vrsqrt.pop %v2153
      %v2157 = vrsqrt.pop %v2154
      %v2158 = vrsqrt.pop %v2155
      %v2159 = vmul.f32 %v2138, %v2156
      %v2160 = vmul.f32 %v2139, %v2157
      %v2161 = vmul.f32 %v2140, %v2158
      %v2163 = vlaneseq
      %v2164 = vshrl.u32 %v2163, 7
      %v2165 = vsub.s32 0, %v2164
      %v2166 = vrot.slane %v2127, %v2165
      %v2168 = vmul.f32 %v2159, %v2166
      %v2169 = vmul.f32 %v2160, %v2166
      %v2170 = vmul.f32 %v2161, %v2166
      %v2171 = vadd.f32 %v2168, 0.0
      %v2172 = vadd.f32 %v2169, 0.0
      %v2173 = vadd.f32 %v2170, 0.0
      %v2174 = vpack.c.bf16 %v2172, %v2171
      %v2175 = vpack.c.bf16 %v2173, %v2173
      %v2176 = vld [vmem:[%s613] sm:$0xf]
      %v2177 = vld [vmem:[%s613 + $0x4] sm:$0xf]
      %v2178 = vld [vmem:[%s613 + $0x8] sm:$0xf]
      %v2179 = vld [vmem:[%s613 + $0xc] sm:$0xf]
      %v2180 = vld [vmem:[%s613 + $0x10] sm:$0xf]
      %v2181 = vld [vmem:[%s613 + $0x14] sm:$0xf]
      %v2182 = vld [vmem:[%s613 + $0x18] sm:$0xf]
      %v2183 = vld [vmem:[%s613 + $0x1c] sm:$0xf]
      %v2184 = vld [vmem:[%s613 + $0x20] sm:$0xf]
      %v2185 = vld [vmem:[%s613 + $0x24] sm:$0xf]
      %v2186 = vld [vmem:[%s613 + $0x28] sm:$0xf]
      %v2187 = vld [vmem:[%s613 + $0x2c] sm:$0xf]
      %v2188 = vld [vmem:[%s613 + $0x30] sm:$0xf]
      %v2189 = vld [vmem:[%s613 + $0x34] sm:$0xf]
      %v2190 = vld [vmem:[%s613 + $0x38] sm:$0xf]
      %v2191 = vld [vmem:[%s613 + $0x3c] sm:$0xf]
      %v2208 = vunpack.c.l.b16 %v2176
      %v2209 = vunpack.c.l.b16 %v2177
      %v2210 = vunpack.c.l.b16 %v2178
      %v2211 = vunpack.c.l.b16 %v2179
      %v2212 = vunpack.c.l.b16 %v2180
      %v2213 = vunpack.c.l.b16 %v2181
      %v2214 = vunpack.c.l.b16 %v2182
      %v2215 = vunpack.c.l.b16 %v2183
      %v2216 = vunpack.c.l.b16 %v2184
      %v2217 = vunpack.c.l.b16 %v2185
      %v2218 = vunpack.c.l.b16 %v2186
      %v2219 = vunpack.c.l.b16 %v2187
      %v2220 = vunpack.c.l.b16 %v2188
      %v2221 = vunpack.c.l.b16 %v2189
      %v2222 = vunpack.c.l.b16 %v2190
      %v2223 = vunpack.c.l.b16 %v2191
      %v2224 = vpack.c.b16 %v2209, %v2208
      %v2225 = vpack.c.b16 %v2211, %v2210
      %v2226 = vpack.c.b16 %v2213, %v2212
      %v2227 = vpack.c.b16 %v2215, %v2214
      %v2228 = vpack.c.b16 %v2217, %v2216
      %v2229 = vpack.c.b16 %v2219, %v2218
      %v2230 = vpack.c.b16 %v2221, %v2220
      %v2231 = vpack.c.b16 %v2223, %v2222
      %2240 = vmatprep.subr.bf16.mxu0 0
      %2241 = vmatpush1.bf16.msra.mxu0 %v2231
      %2242 = vmatprep.subr.bf16.mxu0 0
      %2243 = vmatpush1.bf16.msra.mxu0 %v2230
      %2244 = vmatprep.subr.bf16.mxu0 0
      %2245 = vmatpush1.bf16.msra.mxu0 %v2229
      %2246 = vmatprep.subr.bf16.mxu0 0
      %2247 = vmatpush1.bf16.msra.mxu0 %v2228
      %2248 = vmatprep.subr.bf16.mxu0 0
      %2249 = vmatpush1.bf16.msra.mxu0 %v2227
      %2250 = vmatprep.subr.bf16.mxu0 0
      %2251 = vmatpush1.bf16.msra.mxu0 %v2226
      %2252 = vmatprep.subr.bf16.mxu0 0
      %2253 = vmatpush1.bf16.msra.mxu0 %v2225
      %2254 = vmatprep.subr.bf16.mxu0 0
      %2255 = vmatpush1.bf16.msra.mxu0 %v2224
      %2256 = vmatprep.subr.bf16.mxu0 0
      %2257 = vmatpush2.bf16.msra.mxu0 0
      %2258 = vmatprep.subr.bf16.mxu0 0
      %2259 = vmatpush2.bf16.msra.mxu0 0
      %2260 = vmatprep.subr.bf16.mxu0 0
      %2261 = vmatpush2.bf16.msra.mxu0 0
      %2262 = vmatprep.subr.bf16.mxu0 0
      %2263 = vmatpush2.bf16.msra.mxu0 0
      %2264 = vmatprep.subr.bf16.mxu0 0
      %2265 = vmatpush2.bf16.msra.mxu0 0
      %2266 = vmatprep.subr.bf16.mxu0 0
      %2267 = vmatpush2.bf16.msra.mxu0 0
      %2268 = vmatprep.subr.bf16.mxu0 0
      %2269 = vmatpush2.bf16.msra.mxu0 0
      %2270 = vmatprep.subr.bf16.mxu0 0
      %2271 = vmatpush2.bf16.msra.mxu0 0
      %2272 = vmatprep.mubr.bf16.mxu0 0
      %2273 = vmatmul.mubr.bf16.gmra.mxu0 %v2174
      %v2274 = vpop.f32.mrf.mxu0
      %v2275 = vadd.f32 0.0, %v2274
      %v2276 = vpop.f32.mrf.mxu0
      %v2277 = vpop.f32.mrf.mxu0
      %v2278 = vadd.f32 0.0, %v2277
      %v2279 = vpop.f32.mrf.mxu0
      %2280 = vmatprep.mubr.bf16.mxu0 0
      %2281 = vmatmul.mubr.bf16.gmra.mxu0 %v2175
      %v2282 = vpop.f32.mrf.mxu0
      %v2283 = vadd.f32 0.0, %v2282
      %v2284 = vpop.f32.mrf.mxu0
      %v2285 = vpop.f32.mrf.mxu0
      %v2286 = vpop.f32.mrf.mxu0
      %2287 = vdwg.mxu0
      %v2288 = vadd.f32 %v1973, %v2275
      %v2289 = vadd.f32 %v1974, %v2278
      %v2290 = vadd.f32 %v1975, %v2283
      %2291 = vst.msk [vmem:[#allocation3] sm:$0xff] %vm700, %v2288
      %2292 = vst.msk [vmem:[#allocation3 + $0x8] sm:$0xff] %vm700, %v2289
      %2293 = vst.msk [vmem:[#allocation3 + $0x10] sm:$0xff] %vm700, %v2290
      %p2294 = scmp.eq.s32.totalorder %s28, 1
      // Predicated region
      $region80: #{perceiver_resampler.1} parent=67 // pred_check
        %p2295 = pneg %p2294
      $region81: #{perceiver_resampler.1} parent=67 // pred_check_branch
        %2297 = sbr.rel (%p2295) target = $region83
      $region82: #{perceiver_resampler.1} parent=67 // pred_region
        %v2298 = vld [vmem:[#allocation3] sm:$0xff]
        %v2299 = vld [vmem:[#allocation3 + $0x8] sm:$0xff]
        %v2300 = vld [vmem:[#allocation3 + $0x10] sm:$0xff]
        %v2304 = vcombine.high %v2298, %v2298
        %v2305 = vcombine.high %v2299, %v2299
        %v2306 = vcombine.high %v2300, %v2300
        %v2308 = vcombine.low %v2298, %v2304
        %v2309 = vcombine.low %v2305, %v2300
        %2312 = vst.msk [vmem:[%s619] sm:$0xff] %vm700, %v2308
        %vm2313 = vcmask 257024
        %2314 = vst.msk [vmem:[%s619 + $0x8] sm:$0xf] %vm2313, %v2299
        %2315 = vst.msk [vmem:[%s619 + $0x10] sm:$0xff] %vm700, %v2309
        %2316 = vst.msk [vmem:[%s619 + $0x18] sm:$0xf] %vm2313, %v2306
      $region83: #{perceiver_resampler.1} parent=67 // pred_fallthru
        _
      %s2317 = smul.u32 2, %s27
      %p2318 = scmp.lt.s32.totalorder %s2317, 1
      %s2319 = scalar_select %p2318, %s2317, 1
      %s2320 = smul.addr %s2319, 2
      %s2321 = smul.addr %s2320, 8
      %s2322 = scalar_lea.vmem %s12, %s2321
      // Predicated region
      $region84: #{perceiver_resampler.1} parent=67 // pred_check
        %p2323 = pneg %p360
      $region85: #{perceiver_resampler.1} parent=67 // pred_check_branch
        %2325 = sbr.rel (%p2323) target = $region87
      $region86: #{perceiver_resampler.1} parent=67 // pred_region
        %s2326 = smul.u32 2, %s27
      $region87: #{perceiver_resampler.1} parent=67 // pred_fallthru
        _
      // Predicated region
      $region88: #{perceiver_resampler.1} parent=67 // pred_check
        %p2327 = pneg %p360
      $region89: #{perceiver_resampler.1} parent=67 // pred_check_branch
        %2329 = sbr.rel (%p2327) target = $region91
      $region90: #{perceiver_resampler.1} parent=67 // pred_region
        %s2330 = smul.u32 2, %s27
        %p2331 = scmp.lt.s32.totalorder %s2330, 1
        %s2332 = scalar_select %p2331, %s2330, 1
        %s2333 = smul.addr %s2332, 2
        %s2334 = smul.addr %s2333, 8
        %s2335 = scalar_lea.vmem %s12, %s2334
      $region91: #{perceiver_resampler.1} parent=67 // pred_fallthru
        _
    $region68: #{perceiver_resampler.1} parent=5 // pred_fallthru
      _
    %p2336 = scmp.le.s32.totalorder 2, %s18
    // Predicated region
    $region92: #{perceiver_resampler.1} parent=5 // pred_check
      %p2337 = pneg %p2336
    $region93: #{perceiver_resampler.1} parent=5 // pred_check_branch
      %2339 = sbr.rel (%p2337) target = $region95
    $region94: #{perceiver_resampler.1} parent=5 // pred_region
      %s2340 = ssub.s32 %s18, 2
    $region95: #{perceiver_resampler.1} parent=5 // pred_fallthru
      _
  $region6: #{perceiver_resampler.1} parent=0 // loop_footer
    %s22 = sadd.s32 1, %s18
  $region7: #{perceiver_resampler.1} parent=0 // loop_footer_branch
    %17 = sbr.rel target = $region3
  $region8: #{perceiver_resampler.1} parent=0 // loop_exit
    _

</llo_original>
